<compile_context>
chip_gen: v7x
topology: tpu7x:2x2x1
jax: 0.10.0
libtpu: 0.0.40
codegen_flags: <defaults>
</compile_context>

<pallas_src>
import jax
import jax.numpy as jnp
from jax import lax
from jax.experimental import pallas as pl
from jax.experimental.pallas import tpu as pltpu


def _rpn_head_kernel(x_ref, halo_ref, w3_ref, b3_ref, wh_ref, bh_ref,
                     out_ref, xpad_ref):
    # x_ref:    (1, TH, W, C)   bf16  current row-tile of one image
    # halo_ref: (1, 2, W, C)    bf16  row above / row below (zeros at image edge)
    # w3_ref:   (9, C, C)       bf16  3x3 conv weights, taps flattened row-major
    # b3_ref:   (1, C)          f32
    # wh_ref:   (C, 5A)         bf16  fused [cls | bbox] 1x1 head weights
    # bh_ref:   (1, 5A)         f32
    # out_ref:  (1, TH, W, 5A)  f32
    # xpad_ref: (TH+3, W+2, C)  bf16  zero-bordered halo'd tile (+1 spare zero row)
    _, TH, W, C = x_ref.shape
    Wp = W + 2
    CO = wh_ref.shape[1]
    L = TH * Wp

    # Zero the width-halo columns and the spare bottom row every step (cheap;
    # everything else below is fully overwritten, so this is megacore-safe).
    zcol = jnp.zeros((TH + 3, 1, C), xpad_ref.dtype)
    xpad_ref[:, 0:1, :] = zcol
    xpad_ref[:, Wp - 1:Wp, :] = zcol
    xpad_ref[TH + 2:TH + 3, :, :] = jnp.zeros((1, Wp, C), xpad_ref.dtype)

    # Assemble the zero-padded tile in VMEM -- no host-side jnp.pad round trip.
    hal = halo_ref[...]                                            # (1, 2, W, C)
    xpad_ref[0:1, 1:W + 1, :] = hal[0, 0:1].astype(xpad_ref.dtype)
    xpad_ref[TH + 1:TH + 2, 1:W + 1, :] = hal[0, 1:2].astype(xpad_ref.dtype)
    xpad_ref[1:TH + 1, 1:W + 1, :] = x_ref[0].astype(xpad_ref.dtype)

    # Flatten once; every 3x3 tap is then a contiguous sublane-window slice.
    xf = xpad_ref[...].reshape((TH + 3) * Wp, C)

    # 3x3 "same" conv as 9 shifted matmuls, f32 accumulation.  acc keeps the
    # 2 junk columns per output row; they are dropped at the output write.
    acc = jnp.zeros((L, C), jnp.float32)
    for dy in range(3):
        for dx in range(3):
            s = dy * Wp + dx
            acc = acc + jnp.dot(xf[s:s + L, :], w3_ref[dy * 3 + dx],
                                preferred_element_type=jnp.float32)

    t = jnp.maximum(acc + b3_ref[...], 0.0)                        # bias + ReLU (f32)

    # Fused 1x1 heads (cls_logits | bbox_pred) as a single channel matmul.
    head = jnp.dot(t.astype(wh_ref.dtype), wh_ref[...],
                   preferred_element_type=jnp.float32) + bh_ref[...]

    out_ref[...] = (head.reshape(1, TH, Wp, CO)[:, :, :W, :]
                    .astype(out_ref.dtype))


def _pick_tile_h(H, W, C, CO, budget_bytes=8 * 1024 * 1024):
    """Largest divisor of H whose per-step VMEM working set stays under budget
    (keeps us inside the v5e/v6e/v7x scoped-VMEM defaults)."""
    per_row = (2 * 2 * W * C            # double-buffered bf16 input block
               + 2 * (W + 2) * C        # bf16 padded scratch
               + 4 * (W + 2) * C        # f32 conv accumulator
               + 4 * (W + 2) * C        # f32 relu activations
               + 2 * 4 * W * CO)        # double-buffered f32 fused output block
    t = int(max(1, min(H, budget_bytes // max(per_row, 1))))
    while H % t:
        t -= 1
    return t


def _rpn_head_level(x_nhwc, w3p, b3p, wh, bh, tile_h=None):
    """Run the fused RPN head on one NHWC feature level via pallas_call."""
    N, H, W, C = x_nhwc.shape
    CO = wh.shape[1]
    th = tile_h if tile_h is not None else _pick_tile_h(H, W, C, CO)
    th = max(1, min(int(th), H))
    while H % th:
        th -= 1
    nH = H // th

    x = x_nhwc.astype(jnp.bfloat16)

    # Halo rows for tile h: row (h*th - 1) above and row ((h+1)*th) below,
    # zero-filled at the image border.  Shape (N, 2*nH, W, C), ~2/th of the
    # input, instead of re-materializing the whole padded image in HBM.
    zrow = jnp.zeros((N, 1, W, C), x.dtype)
    top = jnp.concatenate([zrow, x[:, th - 1:H - 1:th]], axis=1)   # (N, nH, W, C)
    bot = jnp.concatenate([x[:, th:H:th], zrow], axis=1)           # (N, nH, W, C)
    halo = jnp.stack([top, bot], axis=2).reshape(N, 2 * nH, W, C)

    out = pl.pallas_call(
        _rpn_head_kernel,
        out_shape=jax.ShapeDtypeStruct((N, H, W, CO), jnp.float32),
        grid=(N, nH),
        in_specs=[
            pl.BlockSpec((1, th, W, C), lambda n, h: (n, h, 0, 0)),
            pl.BlockSpec((1, 2, W, C), lambda n, h: (n, h, 0, 0)),
            pl.BlockSpec((9, C, C), lambda n, h: (0, 0, 0)),
            pl.BlockSpec((1, C), lambda n, h: (0, 0)),
            pl.BlockSpec((C, CO), lambda n, h: (0, 0)),
            pl.BlockSpec((1, CO), lambda n, h: (0, 0)),
        ],
        out_specs=pl.BlockSpec((1, th, W, CO), lambda n, h: (n, h, 0, 0)),
        scratch_shapes=[pltpu.VMEM((th + 3, W + 2, C), jnp.bfloat16)],
        compiler_params=pltpu.CompilerParams(
            dimension_semantics=("parallel", "parallel")),
    )(x, halo, w3p, b3p, wh, bh)
    return out


def rpn_head_forward(features_nhwc, params, tile_h=None):
    """Pallas equivalent of RPNHead.forward on NHWC feature maps.
    Returns per-level (objectness (N,H,W,A), bbox_deltas (N,H,W,4A))."""
    w3, b3, wc, bc, wb, bb = params
    C, A = wc.shape
    w3p = jnp.asarray(w3, jnp.bfloat16).reshape(9, C, C)           # HWIO -> taps
    b3p = jnp.asarray(b3, jnp.float32).reshape(1, C)
    wh = jnp.concatenate([wc, wb], axis=1).astype(jnp.bfloat16)    # (C, 5A) fused
    bh = jnp.concatenate([bc.reshape(1, -1), bb.reshape(1, -1)],
                         axis=1).astype(jnp.float32)               # (1, 5A)
    logits, bbox = [], []
    for f in features_nhwc:
        o = _rpn_head_level(f, w3p, b3p, wh, bh, tile_h)
        logits.append(o[..., :A])
        bbox.append(o[..., A:])
    return logits, bbox


def concat_box_prediction_layers(box_cls, box_regression):
    """NHWC equivalent of torchvision's concat_box_prediction_layers: with
    NHWC head outputs the (N, A, C, H, W) -> (N, H*W*A, C) permute is a pure
    reshape.  Returns objectness (-1, 1) and box deltas (-1, 4)."""
    N = box_cls[0].shape[0]
    cls_flat = [c.reshape(N, -1, 1) for c in box_cls]
    reg_flat = [r.reshape(N, -1, 4) for r in box_regression]
    return (jnp.concatenate(cls_flat, axis=1).reshape(-1, 1),
            jnp.concatenate(reg_flat, axis=1).reshape(-1, 4))


def _reference_level(x_nhwc, w3, b3, wc, bc, wb, bb):
    """Pure-JAX reference (XLA convs) with the same bf16-operand / f32-accum
    arithmetic as the kernel."""
    dn = ("NHWC", "HWIO", "NHWC")
    xb = x_nhwc.astype(jnp.bfloat16)
    t = lax.conv_general_dilated(xb, w3.astype(jnp.bfloat16), (1, 1), "SAME",
                                 dimension_numbers=dn,
                                 preferred_element_type=jnp.float32)
    t = jnp.maximum(t + b3.reshape(1, 1, 1, -1), 0.0)
    tb = t.astype(jnp.bfloat16)
    lg = lax.conv_general_dilated(
        tb, wc.astype(jnp.bfloat16).reshape(1, 1, *wc.shape), (1, 1), "SAME",
        dimension_numbers=dn, preferred_element_type=jnp.float32
    ) + bc.reshape(1, 1, 1, -1)
    bx = lax.conv_general_dilated(
        tb, wb.astype(jnp.bfloat16).reshape(1, 1, *wb.shape), (1, 1), "SAME",
        dimension_numbers=dn, preferred_element_type=jnp.float32
    ) + bb.reshape(1, 1, 1, -1)
    return lg, bx


if __name__ == "__main__":
    in_channels = 4      # real RPN configs use C=256 (lane axis full)
    num_anchors = 3

    key = jax.random.PRNGKey(0)
    k_w3, k_b3, k_wc, k_bc, k_wb, k_bb, k_x0, k_x1 = jax.random.split(key, 8)

    # Conv weights in HWIO (3x3) / IO (1x1) layout.  Biases made nonzero so the
    # bias path is actually exercised by the self-check.
    w3 = 0.01 * jax.random.normal(k_w3, (3, 3, in_channels, in_channels), jnp.float32)
    b3 = 0.01 * jax.random.normal(k_b3, (in_channels,), jnp.float32)
    wc = 0.01 * jax.random.normal(k_wc, (in_channels, num_anchors), jnp.float32)
    bc = 0.01 * jax.random.normal(k_bc, (num_anchors,), jnp.float32)
    wb = 0.01 * jax.random.normal(k_wb, (in_channels, 4 * num_anchors), jnp.float32)
    bb = 0.01 * jax.random.normal(k_bb, (4 * num_anchors,), jnp.float32)
    params = (w3, b3, wc, bc, wb, bb)

    # Two FPN-style feature levels, constructed NCHW like PyTorch and converted
    # to NHWC once at the boundary.
    # TODO(synk): keep the whole backbone NHWC end-to-end so this transpose
    # disappears entirely (the head itself is NHWC in/out already).
    feats_nchw = [
        jax.random.normal(k_x0, (2, in_channels, 16, 16), jnp.float32),
        jax.random.normal(k_x1, (2, in_channels, 8, 8), jnp.float32),
    ]
    feats = [jnp.transpose(f, (0, 2, 3, 1)) for f in feats_nchw]

    # Exercise both the multi-tile (halo) path and the whole-image path.
    logits = bbox = None
    for tile_h in (4, None):
        logits, bbox = rpn_head_forward(feats, params, tile_h=tile_h)
        jax.block_until_ready(logits)
        jax.block_until_ready(bbox)
        for f, lg, bx in zip(feats, logits, bbox):
            lg_ref, bx_ref = _reference_level(f, *params)
            assert jnp.allclose(lg, lg_ref, atol=3e-5, rtol=1e-2), "cls_logits mismatch"
            assert jnp.allclose(bx, bx_ref, atol=3e-5, rtol=1e-2), "bbox_pred mismatch"

    # Downstream flattening semantics of RegionProposalNetwork.forward.
    obj, deltas = concat_box_prediction_layers(logits, bbox)
    n_total = sum(f.shape[0] * f.shape[1] * f.shape[2] * num_anchors for f in feats)
    assert obj.shape == (n_total, 1) and deltas.shape == (n_total, 4)

    # TODO(synk): anchor generation, box decoding/clipping, per-image top-k and
    # NMS (filter_proposals), and the training losses are data-dependent /
    # dynamic-shape and are not implemented as Pallas kernels.
    print("KERNEL_OK")
</pallas_src>

<mosaic_0001>
module attributes {stable_mosaic.version = 11 : i64} {
  func.func @_rpn_head_kernel(%arg0: i32, %arg1: i32, %arg2: memref<1x4x16x4xbf16, #tpu.memory_space<vmem>>, %arg3: memref<1x2x16x4xbf16, #tpu.memory_space<vmem>>, %arg4: memref<9x4x4xbf16, #tpu.memory_space<vmem>>, %arg5: memref<1x4xf32, #tpu.memory_space<vmem>>, %arg6: memref<4x15xbf16, #tpu.memory_space<vmem>>, %arg7: memref<1x15xf32, #tpu.memory_space<vmem>>, %arg8: memref<1x4x16x15xf32, #tpu.memory_space<vmem>>, %arg9: memref<7x18x4xbf16, #tpu.memory_space<vmem>>) attributes {dimension_semantics = [#tpu.dimension_semantics<parallel>, #tpu.dimension_semantics<parallel>], iteration_bounds = array<i64: 2, 4>, scalar_prefetch = 0 : i64, scratch_operands = 1 : i64, tpu.core_type = #tpu.core_type<tc>, window_params = [{transform_indices = @transform_0, window_bounds = array<i64: 1, 4, 16, 4>}, {transform_indices = @transform_1, window_bounds = array<i64: 1, 2, 16, 4>}, {pipeline_mode = #tpu.pipeline_mode<synchronous>, transform_indices = @transform_2, window_bounds = array<i64: 9, 4, 4>}, {pipeline_mode = #tpu.pipeline_mode<synchronous>, transform_indices = @transform_3, window_bounds = array<i64: 1, 4>}, {pipeline_mode = #tpu.pipeline_mode<synchronous>, transform_indices = @transform_4, window_bounds = array<i64: 4, 15>}, {pipeline_mode = #tpu.pipeline_mode<synchronous>, transform_indices = @transform_5, window_bounds = array<i64: 1, 15>}, {transform_indices = @transform_6, window_bounds = array<i64: 1, 4, 16, 15>}]} {
    %cst = arith.constant 0.000000e+00 : bf16
    %0 = vector.broadcast %cst : bf16 to vector<7x1x4xbf16>
    %c0 = arith.constant 0 : index
    %c0_0 = arith.constant 0 : index
    %c0_1 = arith.constant 0 : index
    %1 = vector.load %arg9[%c0, %c0_0, %c0_1] : memref<7x18x4xbf16, #tpu.memory_space<vmem>>, vector<7x1x4xbf16>
    tpu.vector_store %arg9[%c0, %c0_0, %c0_1], %0 {strides = array<i32>} : memref<7x18x4xbf16, #tpu.memory_space<vmem>>, vector<7x1x4xbf16>,
    %c0_2 = arith.constant 0 : index
    %c17 = arith.constant 17 : index
    %c0_3 = arith.constant 0 : index
    %2 = vector.load %arg9[%c0_2, %c17, %c0_3] : memref<7x18x4xbf16, #tpu.memory_space<vmem>>, vector<7x1x4xbf16>
    tpu.vector_store %arg9[%c0_2, %c17, %c0_3], %0 {strides = array<i32>} : memref<7x18x4xbf16, #tpu.memory_space<vmem>>, vector<7x1x4xbf16>,
    %cst_4 = arith.constant 0.000000e+00 : bf16
    %3 = vector.broadcast %cst_4 : bf16 to vector<1x18x4xbf16>
    %c6 = arith.constant 6 : index
    %c0_5 = arith.constant 0 : index
    %c0_6 = arith.constant 0 : index
    %4 = vector.load %arg9[%c6, %c0_5, %c0_6] : memref<7x18x4xbf16, #tpu.memory_space<vmem>>, vector<1x18x4xbf16>
    tpu.vector_store %arg9[%c6, %c0_5, %c0_6], %3 {strides = array<i32>} : memref<7x18x4xbf16, #tpu.memory_space<vmem>>, vector<1x18x4xbf16>,
    %c0_7 = arith.constant 0 : index
    %c0_8 = arith.constant 0 : index
    %c0_9 = arith.constant 0 : index
    %c0_10 = arith.constant 0 : index
    %5 = vector.load %arg3[%c0_7, %c0_8, %c0_9, %c0_10] : memref<1x2x16x4xbf16, #tpu.memory_space<vmem>>, vector<1x2x16x4xbf16>
    %6 = vector.extract_strided_slice %5 {offsets = [0, 0, 0, 0], sizes = [1, 1, 16, 4], strides = [1, 1, 1, 1]} : vector<1x2x16x4xbf16> to vector<1x1x16x4xbf16>
    %7 = vector.shape_cast %6 : vector<1x1x16x4xbf16> to vector<1x16x4xbf16>
    %c0_11 = arith.constant 0 : index
    %c1 = arith.constant 1 : index
    %c0_12 = arith.constant 0 : index
    %8 = vector.load %arg9[%c0_11, %c1, %c0_12] : memref<7x18x4xbf16, #tpu.memory_space<vmem>>, vector<1x16x4xbf16>
    tpu.vector_store %arg9[%c0_11, %c1, %c0_12], %7 {strides = array<i32>} : memref<7x18x4xbf16, #tpu.memory_space<vmem>>, vector<1x16x4xbf16>,
    %9 = vector.extract_strided_slice %5 {offsets = [0, 1, 0, 0], sizes = [1, 1, 16, 4], strides = [1, 1, 1, 1]} : vector<1x2x16x4xbf16> to vector<1x1x16x4xbf16>
    %10 = vector.shape_cast %9 : vector<1x1x16x4xbf16> to vector<1x16x4xbf16>
    %c5 = arith.constant 5 : index
    %c1_13 = arith.constant 1 : index
    %c0_14 = arith.constant 0 : index
    %11 = vector.load %arg9[%c5, %c1_13, %c0_14] : memref<7x18x4xbf16, #tpu.memory_space<vmem>>, vector<1x16x4xbf16>
    tpu.vector_store %arg9[%c5, %c1_13, %c0_14], %10 {strides = array<i32>} : memref<7x18x4xbf16, #tpu.memory_space<vmem>>, vector<1x16x4xbf16>,
    %c0_15 = arith.constant 0 : index
    %c0_16 = arith.constant 0 : index
    %c0_17 = arith.constant 0 : index
    %c0_18 = arith.constant 0 : index
    %12 = vector.load %arg2[%c0_15, %c0_16, %c0_17, %c0_18] : memref<1x4x16x4xbf16, #tpu.memory_space<vmem>>, vector<1x4x16x4xbf16>
    %13 = vector.shape_cast %12 : vector<1x4x16x4xbf16> to vector<4x16x4xbf16>
    %c1_19 = arith.constant 1 : index
    %c1_20 = arith.constant 1 : index
    %c0_21 = arith.constant 0 : index
    %14 = vector.load %arg9[%c1_19, %c1_20, %c0_21] : memref<7x18x4xbf16, #tpu.memory_space<vmem>>, vector<4x16x4xbf16>
    tpu.vector_store %arg9[%c1_19, %c1_20, %c0_21], %13 {strides = array<i32>} : memref<7x18x4xbf16, #tpu.memory_space<vmem>>, vector<4x16x4xbf16>,
    %c0_22 = arith.constant 0 : index
    %c0_23 = arith.constant 0 : index
    %c0_24 = arith.constant 0 : index
    %15 = vector.load %arg9[%c0_22, %c0_23, %c0_24] : memref<7x18x4xbf16, #tpu.memory_space<vmem>>, vector<7x18x4xbf16>
    %16 = vector.shape_cast %15 : vector<7x18x4xbf16> to vector<126x4xbf16>
    %cst_25 = arith.constant 0.000000e+00 : f32
    %17 = vector.broadcast %cst_25 : f32 to vector<72x4xf32>
    %18 = vector.extract_strided_slice %16 {offsets = [0, 0], sizes = [72, 4], strides = [1, 1]} : vector<126x4xbf16> to vector<72x4xbf16>
    %c0_26 = arith.constant 0 : index
    %c0_27 = arith.constant 0 : index
    %c0_28 = arith.constant 0 : index
    %19 = vector.load %arg4[%c0_26, %c0_27, %c0_28] : memref<9x4x4xbf16, #tpu.memory_space<vmem>>, vector<1x4x4xbf16>
    %20 = vector.shape_cast %19 : vector<1x4x4xbf16> to vector<4x4xbf16>
    %cst_29 = arith.constant dense<0.000000e+00> : vector<72x4xf32>
    %21 = tpu.matmul %18, %20, %cst_29 {dimension_numbers = #tpu.dot_dimension_numbers<[1], [0], [0], [1], [0, 0, 1, 1], [], []>} : vector<72x4xbf16>, vector<4x4xbf16>, vector<72x4xf32> -> vector<72x4xf32>
    %22 = arith.addf %17, %21 : vector<72x4xf32>
    %23 = vector.extract_strided_slice %16 {offsets = [1, 0], sizes = [72, 4], strides = [1, 1]} : vector<126x4xbf16> to vector<72x4xbf16>
    %c1_30 = arith.constant 1 : index
    %c0_31 = arith.constant 0 : index
    %c0_32 = arith.constant 0 : index
    %24 = vector.load %arg4[%c1_30, %c0_31, %c0_32] : memref<9x4x4xbf16, #tpu.memory_space<vmem>>, vector<1x4x4xbf16>
    %25 = vector.shape_cast %24 : vector<1x4x4xbf16> to vector<4x4xbf16>
    %cst_33 = arith.constant dense<0.000000e+00> : vector<72x4xf32>
    %26 = tpu.matmul %23, %25, %cst_33 {dimension_numbers = #tpu.dot_dimension_numbers<[1], [0], [0], [1], [0, 0, 1, 1], [], []>} : vector<72x4xbf16>, vector<4x4xbf16>, vector<72x4xf32> -> vector<72x4xf32>
    %27 = arith.addf %22, %26 : vector<72x4xf32>
    %28 = vector.extract_strided_slice %16 {offsets = [2, 0], sizes = [72, 4], strides = [1, 1]} : vector<126x4xbf16> to vector<72x4xbf16>
    %c2 = arith.constant 2 : index
    %c0_34 = arith.constant 0 : index
    %c0_35 = arith.constant 0 : index
    %29 = vector.load %arg4[%c2, %c0_34, %c0_35] : memref<9x4x4xbf16, #tpu.memory_space<vmem>>, vector<1x4x4xbf16>
    %30 = vector.shape_cast %29 : vector<1x4x4xbf16> to vector<4x4xbf16>
    %cst_36 = arith.constant dense<0.000000e+00> : vector<72x4xf32>
    %31 = tpu.matmul %28, %30, %cst_36 {dimension_numbers = #tpu.dot_dimension_numbers<[1], [0], [0], [1], [0, 0, 1, 1], [], []>} : vector<72x4xbf16>, vector<4x4xbf16>, vector<72x4xf32> -> vector<72x4xf32>
    %32 = arith.addf %27, %31 : vector<72x4xf32>
    %33 = vector.extract_strided_slice %16 {offsets = [18, 0], sizes = [72, 4], strides = [1, 1]} : vector<126x4xbf16> to vector<72x4xbf16>
    %c3 = arith.constant 3 : index
    %c0_37 = arith.constant 0 : index
    %c0_38 = arith.constant 0 : index
    %34 = vector.load %arg4[%c3, %c0_37, %c0_38] : memref<9x4x4xbf16, #tpu.memory_space<vmem>>, vector<1x4x4xbf16>
    %35 = vector.shape_cast %34 : vector<1x4x4xbf16> to vector<4x4xbf16>
    %cst_39 = arith.constant dense<0.000000e+00> : vector<72x4xf32>
    %36 = tpu.matmul %33, %35, %cst_39 {dimension_numbers = #tpu.dot_dimension_numbers<[1], [0], [0], [1], [0, 0, 1, 1], [], []>} : vector<72x4xbf16>, vector<4x4xbf16>, vector<72x4xf32> -> vector<72x4xf32>
    %37 = arith.addf %32, %36 : vector<72x4xf32>
    %38 = vector.extract_strided_slice %16 {offsets = [19, 0], sizes = [72, 4], strides = [1, 1]} : vector<126x4xbf16> to vector<72x4xbf16>
    %c4 = arith.constant 4 : index
    %c0_40 = arith.constant 0 : index
    %c0_41 = arith.constant 0 : index
    %39 = vector.load %arg4[%c4, %c0_40, %c0_41] : memref<9x4x4xbf16, #tpu.memory_space<vmem>>, vector<1x4x4xbf16>
    %40 = vector.shape_cast %39 : vector<1x4x4xbf16> to vector<4x4xbf16>
    %cst_42 = arith.constant dense<0.000000e+00> : vector<72x4xf32>
    %41 = tpu.matmul %38, %40, %cst_42 {dimension_numbers = #tpu.dot_dimension_numbers<[1], [0], [0], [1], [0, 0, 1, 1], [], []>} : vector<72x4xbf16>, vector<4x4xbf16>, vector<72x4xf32> -> vector<72x4xf32>
    %42 = arith.addf %37, %41 : vector<72x4xf32>
    %43 = vector.extract_strided_slice %16 {offsets = [20, 0], sizes = [72, 4], strides = [1, 1]} : vector<126x4xbf16> to vector<72x4xbf16>
    %c5_43 = arith.constant 5 : index
    %c0_44 = arith.constant 0 : index
    %c0_45 = arith.constant 0 : index
    %44 = vector.load %arg4[%c5_43, %c0_44, %c0_45] : memref<9x4x4xbf16, #tpu.memory_space<vmem>>, vector<1x4x4xbf16>
    %45 = vector.shape_cast %44 : vector<1x4x4xbf16> to vector<4x4xbf16>
    %cst_46 = arith.constant dense<0.000000e+00> : vector<72x4xf32>
    %46 = tpu.matmul %43, %45, %cst_46 {dimension_numbers = #tpu.dot_dimension_numbers<[1], [0], [0], [1], [0, 0, 1, 1], [], []>} : vector<72x4xbf16>, vector<4x4xbf16>, vector<72x4xf32> -> vector<72x4xf32>
    %47 = arith.addf %42, %46 : vector<72x4xf32>
    %48 = vector.extract_strided_slice %16 {offsets = [36, 0], sizes = [72, 4], strides = [1, 1]} : vector<126x4xbf16> to vector<72x4xbf16>
    %c6_47 = arith.constant 6 : index
    %c0_48 = arith.constant 0 : index
    %c0_49 = arith.constant 0 : index
    %49 = vector.load %arg4[%c6_47, %c0_48, %c0_49] : memref<9x4x4xbf16, #tpu.memory_space<vmem>>, vector<1x4x4xbf16>
    %50 = vector.shape_cast %49 : vector<1x4x4xbf16> to vector<4x4xbf16>
    %cst_50 = arith.constant dense<0.000000e+00> : vector<72x4xf32>
    %51 = tpu.matmul %48, %50, %cst_50 {dimension_numbers = #tpu.dot_dimension_numbers<[1], [0], [0], [1], [0, 0, 1, 1], [], []>} : vector<72x4xbf16>, vector<4x4xbf16>, vector<72x4xf32> -> vector<72x4xf32>
    %52 = arith.addf %47, %51 : vector<72x4xf32>
    %53 = vector.extract_strided_slice %16 {offsets = [37, 0], sizes = [72, 4], strides = [1, 1]} : vector<126x4xbf16> to vector<72x4xbf16>
    %c7 = arith.constant 7 : index
    %c0_51 = arith.constant 0 : index
    %c0_52 = arith.constant 0 : index
    %54 = vector.load %arg4[%c7, %c0_51, %c0_52] : memref<9x4x4xbf16, #tpu.memory_space<vmem>>, vector<1x4x4xbf16>
    %55 = vector.shape_cast %54 : vector<1x4x4xbf16> to vector<4x4xbf16>
    %cst_53 = arith.constant dense<0.000000e+00> : vector<72x4xf32>
    %56 = tpu.matmul %53, %55, %cst_53 {dimension_numbers = #tpu.dot_dimension_numbers<[1], [0], [0], [1], [0, 0, 1, 1], [], []>} : vector<72x4xbf16>, vector<4x4xbf16>, vector<72x4xf32> -> vector<72x4xf32>
    %57 = arith.addf %52, %56 : vector<72x4xf32>
    %58 = vector.extract_strided_slice %16 {offsets = [38, 0], sizes = [72, 4], strides = [1, 1]} : vector<126x4xbf16> to vector<72x4xbf16>
    %c8 = arith.constant 8 : index
    %c0_54 = arith.constant 0 : index
    %c0_55 = arith.constant 0 : index
    %59 = vector.load %arg4[%c8, %c0_54, %c0_55] : memref<9x4x4xbf16, #tpu.memory_space<vmem>>, vector<1x4x4xbf16>
    %60 = vector.shape_cast %59 : vector<1x4x4xbf16> to vector<4x4xbf16>
    %cst_56 = arith.constant dense<0.000000e+00> : vector<72x4xf32>
    %61 = tpu.matmul %58, %60, %cst_56 {dimension_numbers = #tpu.dot_dimension_numbers<[1], [0], [0], [1], [0, 0, 1, 1], [], []>} : vector<72x4xbf16>, vector<4x4xbf16>, vector<72x4xf32> -> vector<72x4xf32>
    %62 = arith.addf %57, %61 : vector<72x4xf32>
    %c0_57 = arith.constant 0 : index
    %c0_58 = arith.constant 0 : index
    %63 = vector.load %arg5[%c0_57, %c0_58] : memref<1x4xf32, #tpu.memory_space<vmem>>, vector<1x4xf32>
    %64 = vector.broadcast %63 : vector<1x4xf32> to vector<72x4xf32>
    %65 = arith.addf %62, %64 : vector<72x4xf32>
    %cst_59 = arith.constant 0.000000e+00 : f32
    %66 = vector.broadcast %cst_59 : f32 to vector<72x4xf32>
    %67 = arith.maximumf %65, %66 : vector<72x4xf32>
    %68 = arith.truncf %67 : vector<72x4xf32> to vector<72x4xbf16>
    %c0_60 = arith.constant 0 : index
    %c0_61 = arith.constant 0 : index
    %69 = vector.load %arg6[%c0_60, %c0_61] : memref<4x15xbf16, #tpu.memory_space<vmem>>, vector<4x15xbf16>
    %cst_62 = arith.constant dense<0.000000e+00> : vector<72x15xf32>
    %70 = tpu.matmul %68, %69, %cst_62 {dimension_numbers = #tpu.dot_dimension_numbers<[1], [0], [0], [1], [0, 0, 1, 1], [], []>} : vector<72x4xbf16>, vector<4x15xbf16>, vector<72x15xf32> -> vector<72x15xf32>
    %c0_63 = arith.constant 0 : index
    %c0_64 = arith.constant 0 : index
    %71 = vector.load %arg7[%c0_63, %c0_64] : memref<1x15xf32, #tpu.memory_space<vmem>>, vector<1x15xf32>
    %72 = vector.broadcast %71 : vector<1x15xf32> to vector<72x15xf32>
    %73 = arith.addf %70, %72 : vector<72x15xf32>
    %74 = vector.shape_cast %73 : vector<72x15xf32> to vector<1x4x18x15xf32>
    %75 = vector.extract_strided_slice %74 {offsets = [0, 0, 0, 0], sizes = [1, 4, 16, 15], strides = [1, 1, 1, 1]} : vector<1x4x18x15xf32> to vector<1x4x16x15xf32>
    %c0_65 = arith.constant 0 : index
    %c0_66 = arith.constant 0 : index
    %c0_67 = arith.constant 0 : index
    %c0_68 = arith.constant 0 : index
    %76 = vector.load %arg8[%c0_65, %c0_66, %c0_67, %c0_68] : memref<1x4x16x15xf32, #tpu.memory_space<vmem>>, vector<1x4x16x15xf32>
    tpu.vector_store %arg8[%c0_65, %c0_66, %c0_67, %c0_68], %75 {strides = array<i32>} : memref<1x4x16x15xf32, #tpu.memory_space<vmem>>, vector<1x4x16x15xf32>,
    return
  }
  func.func @transform_0(%arg0: i32, %arg1: i32) -> (i32, i32, i32, i32) {
    %c0_i32 = arith.constant 0 : i32
    %c0_i32_0 = arith.constant 0 : i32
    %c0_i32_1 = arith.constant 0 : i32
    return %arg0, %arg1, %c0_i32, %c0_i32_0 : i32, i32, i32, i32
  }
  func.func @transform_1(%arg0: i32, %arg1: i32) -> (i32, i32, i32, i32) {
    %c0_i32 = arith.constant 0 : i32
    %c0_i32_0 = arith.constant 0 : i32
    %c0_i32_1 = arith.constant 0 : i32
    return %arg0, %arg1, %c0_i32, %c0_i32_0 : i32, i32, i32, i32
  }
  func.func @transform_2(%arg0: i32, %arg1: i32) -> (i32, i32, i32) {
    %c0_i32 = arith.constant 0 : i32
    %c0_i32_0 = arith.constant 0 : i32
    %c0_i32_1 = arith.constant 0 : i32
    %c0_i32_2 = arith.constant 0 : i32
    return %c0_i32, %c0_i32_0, %c0_i32_1 : i32, i32, i32
  }
  func.func @transform_3(%arg0: i32, %arg1: i32) -> (i32, i32) {
    %c0_i32 = arith.constant 0 : i32
    %c0_i32_0 = arith.constant 0 : i32
    %c0_i32_1 = arith.constant 0 : i32
    return %c0_i32, %c0_i32_0 : i32, i32
  }
  func.func @transform_4(%arg0: i32, %arg1: i32) -> (i32, i32) {
    %c0_i32 = arith.constant 0 : i32
    %c0_i32_0 = arith.constant 0 : i32
    %c0_i32_1 = arith.constant 0 : i32
    return %c0_i32, %c0_i32_0 : i32, i32
  }
  func.func @transform_5(%arg0: i32, %arg1: i32) -> (i32, i32) {
    %c0_i32 = arith.constant 0 : i32
    %c0_i32_0 = arith.constant 0 : i32
    %c0_i32_1 = arith.constant 0 : i32
    return %c0_i32, %c0_i32_0 : i32, i32
  }
  func.func @transform_6(%arg0: i32, %arg1: i32) -> (i32, i32, i32, i32) {
    %c0_i32 = arith.constant 0 : i32
    %c0_i32_0 = arith.constant 0 : i32
    %c0_i32_1 = arith.constant 0 : i32
    return %arg0, %arg1, %c0_i32, %c0_i32_0 : i32, i32, i32, i32
  }
}

</mosaic_0001>

<llo_original>
// kernel: tpu_custom_call.1
$region0: #{tpu_custom_call.1}
  #allocation0 [shape = 'u32[]', space=smem, size = 0x4, offset = 0x4, fixed_abs, tag = 'smem constant byte address 0x4 - core index']
  #allocation1 [shape = 'u32[144,128]{1,0:T(1,128)}', space=vmem, size = 0x12000, scoped, tag = 'internal scratch']
  #allocation2 [shape = 'bf16[7,18,4]{2,1,0:T(8,128)(2,1)}', space=vmem, size = 0xa800, scoped, tag = 'scratch operand']
  %s0 = inlined_call_operand.vmem [shape: bf16[2,16,16,4], index: 0, kind: input, shape index: {}]
  %s1 = inlined_call_operand.vmem [shape: bf16[2,8,16,4], index: 1, kind: input, shape index: {}]
  %s2 = inlined_call_operand.vmem [shape: bf16[9,4,4], index: 2, kind: input, shape index: {}]
  %s3 = inlined_call_operand.vmem [shape: f32[1,4], index: 3, kind: input, shape index: {}]
  %s4 = inlined_call_operand.vmem [shape: bf16[4,15], index: 4, kind: input, shape index: {}]
  %s5 = inlined_call_operand.vmem [shape: f32[1,15], index: 5, kind: input, shape index: {}]
  %s6 = inlined_call_operand.vmem [shape: f32[2,16,16,15], index: 6, kind: output, shape index: {}]
  %s7 = sld [smem:[#allocation0]]
  $region57: #{tpu_custom_call.1} parent=0
    _
  %s9 = ssub.s32 1, %s7
  %s10 = scalar_select 0, %s9, %s7
  loop: start=0, step=1, limit=10
  $region2: #{tpu_custom_call.1} parent=0 // loop_pre_header
    _
  $region3: #{tpu_custom_call.1} parent=0 // loop_header
    %s12 = sphi 0, %s16
    %p13 = scmp.ge.s32.totalorder %s12, 10
    %s19 = sphi 0, %s31
    %s20 = sphi 0, %s27
    %s21 = sphi 0, %s19
    %s22 = sphi 0, %s20
    %s23 = sphi 0, %s21
    %s24 = sphi 0, %s22
    %s36 = sphi 0, %s38
    %s39 = sphi 0, %s36
    %s40 = sphi 0, %s39
    %s56 = sphi 0, %s40
    %s64 = sphi 0, %s66
    %s67 = sphi 0, %s64
    %s68 = sphi 0, %s67
    %s84 = sphi 0, %s68
    %s88 = sphi 0, %s88
    %s90 = sphi 0, %s88
    %s91 = sphi 0, %s90
    %s105 = sphi 0, %s91
    %s109 = sphi 0, %s109
    %s111 = sphi 0, %s109
    %s112 = sphi 0, %s111
    %s126 = sphi 0, %s112
    %s130 = sphi 0, %s130
    %s132 = sphi 0, %s130
    %s133 = sphi 0, %s132
    %s147 = sphi 0, %s133
    %s151 = sphi 0, %s151
    %s153 = sphi 0, %s151
    %s154 = sphi 0, %s153
    %s168 = sphi 0, %s154
    %s176 = sphi 0, %s178
    %s179 = sphi 0, %s176
    %s180 = sphi 0, %s179
    %s196 = sphi 0, %s180
  $region4: #{tpu_custom_call.1} parent=0 // loop_header_branch
    %15 = sbr.rel (%p13) target = $region8
  $region5: #{tpu_custom_call.1} parent=0 // loop_body
    %s17 = ssub.s32 %s12, 1
    %s18 = ssub.s32 %s12, 2
    %s25 = sadd.s32 1, %s20
    %p26 = scmp.ge.s32.totalorder %s25, 4
    %s27 = scalar_select %p26, 0, %s25
    %s28 = sadd.s32 1, %s19
    %s29 = scalar_select %p26, %s28, %s19
    %p30 = scmp.ge.s32.totalorder %s29, 2
    %s31 = scalar_select %p30, 0, %s29
    %s32 = ssub.s32 %s19, %s31
    %s33 = ssub.s32 %s20, %s27
    %s34 = sor.u32 %s32, %s33
    %p35 = scmp.eq.s32.totalorder %s34, 0
    %s37 = sadd.s32 %s36, 1
    %s38 = scalar_select %p35, %s36, %s37
    %p41 = pneg %p35
    %p42 = scmp.eq.s32.totalorder %s12, 7
    %p43 = por %p41, %p42
    %p44 = scmp.ne.s32.totalorder %s36, %s39
    %p45 = scmp.eq.s32.totalorder %s12, 0
    %p46 = por %p44, %p45
    %p47 = scmp.ne.s32.totalorder %s36, %s39
    %p48 = scmp.eq.s32.totalorder %s17, 7
    %p49 = por %p47, %p48
    %p50 = scmp.ne.s32.totalorder %s39, %s40
    %p51 = scmp.eq.s32.totalorder %s17, 0
    %p52 = por %p50, %p51
    %p53 = scmp.ne.s32.totalorder %s39, %s40
    %p54 = scmp.eq.s32.totalorder %s18, 7
    %p55 = por %p53, %p54
    %p57 = scmp.ne.s32.totalorder %s40, %s56
    %p58 = scmp.eq.s32.totalorder %s18, 0
    %p59 = por %p57, %p58
    %s60 = ssub.s32 %s19, %s31
    %s61 = ssub.s32 %s20, %s27
    %s62 = sor.u32 %s60, %s61
    %p63 = scmp.eq.s32.totalorder %s62, 0
    %s65 = sadd.s32 %s64, 1
    %s66 = scalar_select %p63, %s64, %s65
    %p69 = pneg %p63
    %p70 = scmp.eq.s32.totalorder %s12, 7
    %p71 = por %p69, %p70
    %p72 = scmp.ne.s32.totalorder %s64, %s67
    %p73 = scmp.eq.s32.totalorder %s12, 0
    %p74 = por %p72, %p73
    %p75 = scmp.ne.s32.totalorder %s64, %s67
    %p76 = scmp.eq.s32.totalorder %s17, 7
    %p77 = por %p75, %p76
    %p78 = scmp.ne.s32.totalorder %s67, %s68
    %p79 = scmp.eq.s32.totalorder %s17, 0
    %p80 = por %p78, %p79
    %p81 = scmp.ne.s32.totalorder %s67, %s68
    %p82 = scmp.eq.s32.totalorder %s18, 7
    %p83 = por %p81, %p82
    %p85 = scmp.ne.s32.totalorder %s68, %s84
    %p86 = scmp.eq.s32.totalorder %s18, 0
    %p87 = por %p85, %p86
    %s89 = sadd.s32 %s88, 1
    %p92 = scmp.eq.s32.totalorder %s12, 7
    %p93 = scmp.ne.s32.totalorder %s88, %s90
    %p94 = scmp.eq.s32.totalorder %s12, 0
    %p95 = por %p93, %p94
    %p96 = scmp.ne.s32.totalorder %s88, %s90
    %p97 = scmp.eq.s32.totalorder %s17, 7
    %p98 = por %p96, %p97
    %p99 = scmp.ne.s32.totalorder %s90, %s91
    %p100 = scmp.eq.s32.totalorder %s17, 0
    %p101 = por %p99, %p100
    %p102 = scmp.ne.s32.totalorder %s90, %s91
    %p103 = scmp.eq.s32.totalorder %s18, 7
    %p104 = por %p102, %p103
    %p106 = scmp.ne.s32.totalorder %s91, %s105
    %p107 = scmp.eq.s32.totalorder %s18, 0
    %p108 = por %p106, %p107
    %s110 = sadd.s32 %s109, 1
    %p113 = scmp.eq.s32.totalorder %s12, 7
    %p114 = scmp.ne.s32.totalorder %s109, %s111
    %p115 = scmp.eq.s32.totalorder %s12, 0
    %p116 = por %p114, %p115
    %p117 = scmp.ne.s32.totalorder %s109, %s111
    %p118 = scmp.eq.s32.totalorder %s17, 7
    %p119 = por %p117, %p118
    %p120 = scmp.ne.s32.totalorder %s111, %s112
    %p121 = scmp.eq.s32.totalorder %s17, 0
    %p122 = por %p120, %p121
    %p123 = scmp.ne.s32.totalorder %s111, %s112
    %p124 = scmp.eq.s32.totalorder %s18, 7
    %p125 = por %p123, %p124
    %p127 = scmp.ne.s32.totalorder %s112, %s126
    %p128 = scmp.eq.s32.totalorder %s18, 0
    %p129 = por %p127, %p128
    %s131 = sadd.s32 %s130, 1
    %p134 = scmp.eq.s32.totalorder %s12, 7
    %p135 = scmp.ne.s32.totalorder %s130, %s132
    %p136 = scmp.eq.s32.totalorder %s12, 0
    %p137 = por %p135, %p136
    %p138 = scmp.ne.s32.totalorder %s130, %s132
    %p139 = scmp.eq.s32.totalorder %s17, 7
    %p140 = por %p138, %p139
    %p141 = scmp.ne.s32.totalorder %s132, %s133
    %p142 = scmp.eq.s32.totalorder %s17, 0
    %p143 = por %p141, %p142
    %p144 = scmp.ne.s32.totalorder %s132, %s133
    %p145 = scmp.eq.s32.totalorder %s18, 7
    %p146 = por %p144, %p145
    %p148 = scmp.ne.s32.totalorder %s133, %s147
    %p149 = scmp.eq.s32.totalorder %s18, 0
    %p150 = por %p148, %p149
    %s152 = sadd.s32 %s151, 1
    %p155 = scmp.eq.s32.totalorder %s12, 7
    %p156 = scmp.ne.s32.totalorder %s151, %s153
    %p157 = scmp.eq.s32.totalorder %s12, 0
    %p158 = por %p156, %p157
    %p159 = scmp.ne.s32.totalorder %s151, %s153
    %p160 = scmp.eq.s32.totalorder %s17, 7
    %p161 = por %p159, %p160
    %p162 = scmp.ne.s32.totalorder %s153, %s154
    %p163 = scmp.eq.s32.totalorder %s17, 0
    %p164 = por %p162, %p163
    %p165 = scmp.ne.s32.totalorder %s153, %s154
    %p166 = scmp.eq.s32.totalorder %s18, 7
    %p167 = por %p165, %p166
    %p169 = scmp.ne.s32.totalorder %s154, %s168
    %p170 = scmp.eq.s32.totalorder %s18, 0
    %p171 = por %p169, %p170
    %s172 = ssub.s32 %s19, %s31
    %s173 = ssub.s32 %s20, %s27
    %s174 = sor.u32 %s172, %s173
    %p175 = scmp.eq.s32.totalorder %s174, 0
    %s177 = sadd.s32 %s176, 1
    %s178 = scalar_select %p175, %s176, %s177
    %p181 = pneg %p175
    %p182 = scmp.eq.s32.totalorder %s12, 7
    %p183 = por %p181, %p182
    %p184 = scmp.ne.s32.totalorder %s176, %s179
    %p185 = scmp.eq.s32.totalorder %s12, 0
    %p186 = por %p184, %p185
    %p187 = scmp.ne.s32.totalorder %s176, %s179
    %p188 = scmp.eq.s32.totalorder %s17, 7
    %p189 = por %p187, %p188
    %p190 = scmp.ne.s32.totalorder %s179, %s180
    %p191 = scmp.eq.s32.totalorder %s17, 0
    %p192 = por %p190, %p191
    %p193 = scmp.ne.s32.totalorder %s179, %s180
    %p194 = scmp.eq.s32.totalorder %s18, 7
    %p195 = por %p193, %p194
    %p197 = scmp.ne.s32.totalorder %s180, %s196
    %p198 = scmp.eq.s32.totalorder %s18, 0
    %p199 = por %p197, %p198
    %p200 = scmp.le.s32.totalorder 1, %s12
    %p201 = scmp.lt.s32.totalorder %s12, 9
    %p202 = pnand %p200, %p201
    %p203 = pneg %p202
    // Predicated region
    $region9: #{tpu_custom_call.1} parent=5 // pred_check
      _
    $region10: #{tpu_custom_call.1} parent=5 // pred_check_branch
      %205 = sbr.rel (%p202) target = $region12
    $region11: #{tpu_custom_call.1} parent=5 // pred_region
      %s206 = ssub.s32 %s12, 1
      // Predicated region
      $region13: #{tpu_custom_call.1} parent=11 // pred_check
        %p207 = pneg %p101
      $region14: #{tpu_custom_call.1} parent=11 // pred_check_branch
        %209 = sbr.rel (%p207) target = $region16
      $region15: #{tpu_custom_call.1} parent=11 // pred_region
        _
      $region16: #{tpu_custom_call.1} parent=11 // pred_fallthru
        _
      // Predicated region
      $region17: #{tpu_custom_call.1} parent=11 // pred_check
        %p210 = pneg %p122
      $region18: #{tpu_custom_call.1} parent=11 // pred_check_branch
        %212 = sbr.rel (%p210) target = $region20
      $region19: #{tpu_custom_call.1} parent=11 // pred_region
        _
      $region20: #{tpu_custom_call.1} parent=11 // pred_fallthru
        _
      // Predicated region
      $region21: #{tpu_custom_call.1} parent=11 // pred_check
        %p213 = pneg %p143
      $region22: #{tpu_custom_call.1} parent=11 // pred_check_branch
        %215 = sbr.rel (%p213) target = $region24
      $region23: #{tpu_custom_call.1} parent=11 // pred_region
        _
      $region24: #{tpu_custom_call.1} parent=11 // pred_fallthru
        _
      // Predicated region
      $region25: #{tpu_custom_call.1} parent=11 // pred_check
        %p216 = pneg %p164
      $region26: #{tpu_custom_call.1} parent=11 // pred_check_branch
        %218 = sbr.rel (%p216) target = $region28
      $region27: #{tpu_custom_call.1} parent=11 // pred_region
        _
      $region28: #{tpu_custom_call.1} parent=11 // pred_fallthru
        _
    $region12: #{tpu_custom_call.1} parent=5 // pred_fallthru
      _
    %p219 = scmp.lt.s32.totalorder %s12, 8
    // Predicated region
    $region29: #{tpu_custom_call.1} parent=5 // pred_check
      %p220 = pneg %p219
    $region30: #{tpu_custom_call.1} parent=5 // pred_check_branch
      %222 = sbr.rel (%p220) target = $region32
    $region31: #{tpu_custom_call.1} parent=5 // pred_region
      // Predicated region
      $region33: #{tpu_custom_call.1} parent=31 // pred_check
        %p223 = pneg %p46
      $region34: #{tpu_custom_call.1} parent=31 // pred_check_branch
        %225 = sbr.rel (%p223) target = $region36
      $region35: #{tpu_custom_call.1} parent=31 // pred_region
        %s226 = smul.u32 4, %s20
        %p227 = scmp.lt.s32.totalorder %s19, 1
        %s228 = scalar_select %p227, %s19, 1
        %p229 = scmp.lt.s32.totalorder %s226, 15
        %s230 = scalar_select %p229, %s226, 15
        %s231 = smul.addr %s230, 2
        %s232 = smul.addr %s228, 32
        %s233 = sadd.s32 %s231, %s232
        %s234 = smul.addr %s233, 4
        %s235 = scalar_lea.vmem %s0, %s234
        %s236 = smul.u32 4, %s20
      $region36: #{tpu_custom_call.1} parent=31 // pred_fallthru
        _
      // Predicated region
      $region37: #{tpu_custom_call.1} parent=31 // pred_check
        %p237 = pneg %p74
      $region38: #{tpu_custom_call.1} parent=31 // pred_check_branch
        %239 = sbr.rel (%p237) target = $region40
      $region39: #{tpu_custom_call.1} parent=31 // pred_region
        %s240 = smul.u32 2, %s20
        %p241 = scmp.lt.s32.totalorder %s19, 1
        %s242 = scalar_select %p241, %s19, 1
        %p243 = scmp.lt.s32.totalorder %s240, 7
        %s244 = scalar_select %p243, %s240, 7
        %s245 = smul.addr %s244, 2
        %s246 = smul.addr %s242, 16
        %s247 = sadd.s32 %s245, %s246
        %s248 = smul.addr %s247, 4
        %s249 = scalar_lea.vmem %s1, %s248
        %s250 = smul.u32 2, %s20
      $region40: #{tpu_custom_call.1} parent=31 // pred_fallthru
        _
    $region32: #{tpu_custom_call.1} parent=5 // pred_fallthru
      _
    %p251 = scmp.le.s32.totalorder 1, %s12
    %p252 = scmp.lt.s32.totalorder %s12, 9
    %p253 = pnand %p251, %p252
    %p254 = pneg %p253
    // Predicated region
    $region41: #{tpu_custom_call.1} parent=5 // pred_check
      _
    $region42: #{tpu_custom_call.1} parent=5 // pred_check_branch
      %256 = sbr.rel (%p253) target = $region44
    $region43: #{tpu_custom_call.1} parent=5 // pred_region
      %s257 = ssub.s32 %s12, 1
      %s258 = smul.u32 4, %s22
      %p259 = scmp.lt.s32.totalorder %s21, 1
      %s260 = scalar_select %p259, %s21, 1
      %p261 = scmp.lt.s32.totalorder %s258, 15
      %s262 = scalar_select %p261, %s258, 15
      %s263 = smul.addr %s262, 2
      %s264 = smul.addr %s260, 32
      %s265 = sadd.s32 %s263, %s264
      %s266 = smul.addr %s265, 4
      %s267 = scalar_lea.vmem %s0, %s266
      %p268 = pneg %p52
      %p269 = pneg %p49
      %s270 = smul.u32 2, %s22
      %p271 = scmp.lt.s32.totalorder %s21, 1
      %s272 = scalar_select %p271, %s21, 1
      %p273 = scmp.lt.s32.totalorder %s270, 7
      %s274 = scalar_select %p273, %s270, 7
      %s275 = smul.addr %s274, 2
      %s276 = smul.addr %s272, 16
      %s277 = sadd.s32 %s275, %s276
      %s278 = smul.addr %s277, 4
      %s279 = scalar_lea.vmem %s1, %s278
      %p280 = pneg %p80
      %p281 = pneg %p77
      %p282 = pneg %p101
      %p283 = pneg %p98
      %p284 = pneg %p122
      %p285 = pneg %p119
      %p286 = pneg %p143
      %p287 = pneg %p140
      %p288 = pneg %p164
      %p289 = pneg %p161
      %p290 = pneg %p192
      %p291 = pneg %p189
      %s292 = smul.u32 4, %s22
      %p293 = scmp.lt.s32.totalorder %s21, 1
      %s294 = scalar_select %p293, %s21, 1
      %p295 = scmp.lt.s32.totalorder %s292, 15
      %s296 = scalar_select %p295, %s292, 15
      %s297 = smul.addr %s296, 2
      %s298 = smul.addr %s294, 32
      %s299 = sadd.s32 %s297, %s298
      %s300 = smul.addr %s299, 8
      %s301 = scalar_lea.vmem %s6, %s300
      %s302 = smul.u32 4, %s22
      %p303 = scmp.lt.s32.totalorder %s21, 1
      %s304 = scalar_select %p303, %s21, 1
      %p305 = scmp.lt.s32.totalorder %s302, 15
      %s306 = scalar_select %p305, %s302, 15
      %s307 = smul.addr %s306, 2
      %s308 = smul.addr %s304, 32
      %s309 = sadd.s32 %s307, %s308
      %s310 = smul.addr %s309, 4
      %s311 = scalar_lea.vmem %s0, %s310
      %s312 = smul.u32 4, %s22
      %s313 = smul.u32 2, %s22
      %p314 = scmp.lt.s32.totalorder %s21, 1
      %s315 = scalar_select %p314, %s21, 1
      %p316 = scmp.lt.s32.totalorder %s313, 7
      %s317 = scalar_select %p316, %s313, 7
      %s318 = smul.addr %s317, 2
      %s319 = smul.addr %s315, 16
      %s320 = sadd.s32 %s318, %s319
      %s321 = smul.addr %s320, 4
      %s322 = scalar_lea.vmem %s1, %s321
      %s323 = smul.u32 2, %s22
      %s324 = smul.u32 4, %s22
      %p325 = scmp.lt.s32.totalorder %s21, 1
      %s326 = scalar_select %p325, %s21, 1
      %p327 = scmp.lt.s32.totalorder %s324, 15
      %s328 = scalar_select %p327, %s324, 15
      %s329 = smul.addr %s328, 2
      %s330 = smul.addr %s326, 32
      %s331 = sadd.s32 %s329, %s330
      %s332 = smul.addr %s331, 8
      %s333 = scalar_lea.vmem %s6, %s332
      %s334 = smul.u32 4, %s22
      %vm336 = vcmask 24576
      %vm337 = vsmask.f32 256
      %vm338 = vmand %vm336, %vm337
      %v339 = vld [vmem:[#allocation2] sm:$0x1]
      %v340 = vsel %vm338, 0, %v339
      %341 = vst [vmem:[#allocation2] sm:$0x1] %v340
      %v342 = vld [vmem:[#allocation2 + $0xc] sm:$0x1]
      %v343 = vsel %vm338, 0, %v342
      %344 = vst [vmem:[#allocation2 + $0xc] sm:$0x1] %v343
      %v345 = vld [vmem:[#allocation2 + $0x18] sm:$0x1]
      %v346 = vsel %vm338, 0, %v345
      %347 = vst [vmem:[#allocation2 + $0x18] sm:$0x1] %v346
      %v348 = vld [vmem:[#allocation2 + $0x24] sm:$0x1]
      %v349 = vsel %vm338, 0, %v348
      %350 = vst [vmem:[#allocation2 + $0x24] sm:$0x1] %v349
      %v351 = vld [vmem:[#allocation2 + $0x30] sm:$0x1]
      %v352 = vsel %vm338, 0, %v351
      %353 = vst [vmem:[#allocation2 + $0x30] sm:$0x1] %v352
      %v354 = vld [vmem:[#allocation2 + $0x3c] sm:$0x1]
      %v355 = vsel %vm338, 0, %v354
      %356 = vst [vmem:[#allocation2 + $0x3c] sm:$0x1] %v355
      %v357 = vld [vmem:[#allocation2 + $0x48] sm:$0x1]
      %v358 = vsel %vm338, 0, %v357
      %359 = vst [vmem:[#allocation2 + $0x48] sm:$0x1] %v358
      %vm360 = vsmask.f32 7938
      %vm361 = vmand %vm336, %vm360
      %v362 = vld [vmem:[#allocation2 + $0x8] sm:$0x1]
      %v363 = vsel %vm361, 0, %v362
      %364 = vst [vmem:[#allocation2 + $0x8] sm:$0x1] %v363
      %v365 = vld [vmem:[#allocation2 + $0x14] sm:$0x1]
      %v366 = vsel %vm361, 0, %v365
      %367 = vst [vmem:[#allocation2 + $0x14] sm:$0x1] %v366
      %v368 = vld [vmem:[#allocation2 + $0x20] sm:$0x1]
      %v369 = vsel %vm361, 0, %v368
      %370 = vst [vmem:[#allocation2 + $0x20] sm:$0x1] %v369
      %v371 = vld [vmem:[#allocation2 + $0x2c] sm:$0x1]
      %v372 = vsel %vm361, 0, %v371
      %373 = vst [vmem:[#allocation2 + $0x2c] sm:$0x1] %v372
      %v374 = vld [vmem:[#allocation2 + $0x38] sm:$0x1]
      %v375 = vsel %vm361, 0, %v374
      %376 = vst [vmem:[#allocation2 + $0x38] sm:$0x1] %v375
      %v377 = vld [vmem:[#allocation2 + $0x44] sm:$0x1]
      %v378 = vsel %vm361, 0, %v377
      %379 = vst [vmem:[#allocation2 + $0x44] sm:$0x1] %v378
      %v380 = vld [vmem:[#allocation2 + $0x50] sm:$0x1]
      %v381 = vsel %vm361, 0, %v380
      %382 = vst [vmem:[#allocation2 + $0x50] sm:$0x1] %v381
      %s383 = scalar_lea.vmem [#allocation2], 72
      %vm384 = vcmask 27648
      %385 = vst.msk [vmem:[%s383] sm:$0xf] %vm384, 0
      %386 = vst.msk [vmem:[%s383 + $0x4] sm:$0xf] %vm384, 0
      %vm387 = vcmask 24576
      %388 = vst.msk [vmem:[%s383 + $0x8] sm:$0x1] %vm387, 0
      %v389 = vld [vmem:[%s322] sm:$0xf]
      %v390 = vld [vmem:[%s322 + $0x4] sm:$0xf]
      %v391 = vld [vmem:[%s322 + $0x8] sm:$0xf]
      %v392 = vld [vmem:[%s322 + $0xc] sm:$0xf]
      %vm393 = vsmask.f32 4368
      %vm394 = vmor %vm337, %vm393
      %v396 = vshrl.u32 %v389, 16
      %v398 = vrot.slane %v396, 7
      %v399 = vshll.u32 %v389, 16
      %v401 = vor.u32 %v398, %v399
      %v402 = vrot.slane %v398, 4
      %v404 = vshrl.u32 %v390, 16
      %v406 = vrot.slane %v404, 7
      %v407 = vshll.u32 %v390, 16
      %v409 = vor.u32 %v406, %v407
      %v410 = vsel %vm394, %v402, %v409
      %v411 = vrot.slane %v406, 4
      %vm415 = vcmask 27648
      %vm416 = vmand %vm415, %vm360
      %v417 = vld [vmem:[#allocation2] sm:$0xf]
      %v418 = vsel %vm416, %v401, %v417
      %419 = vst [vmem:[#allocation2] sm:$0xf] %v418
      %420 = vst.msk [vmem:[#allocation2 + $0x4] sm:$0xf] %vm384, %v410
      %v421 = vld [vmem:[#allocation2 + $0x8] sm:$0x1]
      %v422 = vsel %vm338, %v411, %v421
      %423 = vst [vmem:[#allocation2 + $0x8] sm:$0x1] %v422
      %v425 = vshrl.u32 %v391, 16
      %v427 = vrot.slane %v425, 7
      %v428 = vshll.u32 %v391, 16
      %v430 = vor.u32 %v427, %v428
      %v431 = vrot.slane %v427, 4
      %v433 = vshrl.u32 %v392, 16
      %v435 = vrot.slane %v433, 7
      %v436 = vshll.u32 %v392, 16
      %v438 = vor.u32 %v435, %v436
      %v439 = vsel %vm394, %v431, %v438
      %v440 = vrot.slane %v435, 4
      %s444 = scalar_lea.vmem [#allocation2], 60
      %v445 = vld [vmem:[%s444] sm:$0xf]
      %v446 = vsel %vm416, %v430, %v445
      %447 = vst [vmem:[%s444] sm:$0xf] %v446
      %448 = vst.msk [vmem:[%s444 + $0x4] sm:$0xf] %vm384, %v439
      %v449 = vld [vmem:[%s444 + $0x8] sm:$0x1]
      %v450 = vsel %vm338, %v440, %v449
      %451 = vst [vmem:[%s444 + $0x8] sm:$0x1] %v450
      %v452 = vld [vmem:[%s311] sm:$0xf]
      %v453 = vld [vmem:[%s311 + $0x4] sm:$0xf]
      %v454 = vld [vmem:[%s311 + $0x8] sm:$0xf]
      %v455 = vld [vmem:[%s311 + $0xc] sm:$0xf]
      %v456 = vld [vmem:[%s311 + $0x10] sm:$0xf]
      %v457 = vld [vmem:[%s311 + $0x14] sm:$0xf]
      %v458 = vld [vmem:[%s311 + $0x18] sm:$0xf]
      %v459 = vld [vmem:[%s311 + $0x1c] sm:$0xf]
      %v461 = vshrl.u32 %v452, 16
      %v463 = vrot.slane %v461, 7
      %v464 = vshll.u32 %v452, 16
      %v466 = vor.u32 %v463, %v464
      %v467 = vrot.slane %v463, 4
      %v469 = vshrl.u32 %v453, 16
      %v471 = vrot.slane %v469, 7
      %v472 = vshll.u32 %v453, 16
      %v474 = vor.u32 %v471, %v472
      %v475 = vsel %vm394, %v467, %v474
      %v476 = vrot.slane %v471, 4
      %v478 = vshrl.u32 %v454, 16
      %v480 = vrot.slane %v478, 7
      %v481 = vshll.u32 %v454, 16
      %v483 = vor.u32 %v480, %v481
      %v484 = vrot.slane %v480, 4
      %v486 = vshrl.u32 %v455, 16
      %v488 = vrot.slane %v486, 7
      %v489 = vshll.u32 %v455, 16
      %v491 = vor.u32 %v488, %v489
      %v492 = vsel %vm394, %v484, %v491
      %v493 = vrot.slane %v488, 4
      %v495 = vshrl.u32 %v456, 16
      %v497 = vrot.slane %v495, 7
      %v498 = vshll.u32 %v456, 16
      %v500 = vor.u32 %v497, %v498
      %v501 = vrot.slane %v497, 4
      %v503 = vshrl.u32 %v457, 16
      %v505 = vrot.slane %v503, 7
      %v506 = vshll.u32 %v457, 16
      %v508 = vor.u32 %v505, %v506
      %v509 = vsel %vm394, %v501, %v508
      %v510 = vrot.slane %v505, 4
      %v512 = vshrl.u32 %v458, 16
      %v514 = vrot.slane %v512, 7
      %v515 = vshll.u32 %v458, 16
      %v517 = vor.u32 %v514, %v515
      %v518 = vrot.slane %v514, 4
      %v520 = vshrl.u32 %v459, 16
      %v522 = vrot.slane %v520, 7
      %v523 = vshll.u32 %v459, 16
      %v525 = vor.u32 %v522, %v523
      %v526 = vsel %vm394, %v518, %v525
      %v527 = vrot.slane %v522, 4
      %s540 = scalar_lea.vmem [#allocation2], 12
      %v541 = vld [vmem:[%s540] sm:$0xf]
      %v542 = vsel %vm416, %v466, %v541
      %543 = vst [vmem:[%s540] sm:$0xf] %v542
      %544 = vst.msk [vmem:[%s540 + $0x4] sm:$0xf] %vm384, %v475
      %v545 = vld [vmem:[%s540 + $0x8] sm:$0x1]
      %v546 = vsel %vm338, %v476, %v545
      %547 = vst [vmem:[%s540 + $0x8] sm:$0x1] %v546
      %v548 = vld [vmem:[%s540 + $0xc] sm:$0xf]
      %v549 = vsel %vm416, %v483, %v548
      %550 = vst [vmem:[%s540 + $0xc] sm:$0xf] %v549
      %551 = vst.msk [vmem:[%s540 + $0x10] sm:$0xf] %vm384, %v492
      %v552 = vld [vmem:[%s540 + $0x14] sm:$0x1]
      %v553 = vsel %vm338, %v493, %v552
      %554 = vst [vmem:[%s540 + $0x14] sm:$0x1] %v553
      %v555 = vld [vmem:[%s540 + $0x18] sm:$0xf]
      %v556 = vsel %vm416, %v500, %v555
      %557 = vst [vmem:[%s540 + $0x18] sm:$0xf] %v556
      %558 = vst.msk [vmem:[%s540 + $0x1c] sm:$0xf] %vm384, %v509
      %v559 = vld [vmem:[%s540 + $0x20] sm:$0x1]
      %v560 = vsel %vm338, %v510, %v559
      %561 = vst [vmem:[%s540 + $0x20] sm:$0x1] %v560
      %v562 = vld [vmem:[%s540 + $0x24] sm:$0xf]
      %v563 = vsel %vm416, %v517, %v562
      %564 = vst [vmem:[%s540 + $0x24] sm:$0xf] %v563
      %565 = vst.msk [vmem:[%s540 + $0x28] sm:$0xf] %vm384, %v526
      %v566 = vld [vmem:[%s540 + $0x2c] sm:$0x1]
      %v567 = vsel %vm338, %v527, %v566
      %568 = vst [vmem:[%s540 + $0x2c] sm:$0x1] %v567
      %v569 = vld [vmem:[#allocation2] sm:$0xf]
      %v570 = vld [vmem:[#allocation2 + $0x4] sm:$0xf]
      %v571 = vld [vmem:[#allocation2 + $0x8] sm:$0x1]
      %v572 = vld [vmem:[#allocation2 + $0xc] sm:$0xf]
      %v573 = vld [vmem:[#allocation2 + $0x10] sm:$0xf]
      %v574 = vld [vmem:[#allocation2 + $0x14] sm:$0x1]
      %v575 = vld [vmem:[#allocation2 + $0x18] sm:$0xf]
      %v576 = vld [vmem:[#allocation2 + $0x1c] sm:$0xf]
      %v577 = vld [vmem:[#allocation2 + $0x20] sm:$0x1]
      %v578 = vld [vmem:[#allocation2 + $0x24] sm:$0xf]
      %v579 = vld [vmem:[#allocation2 + $0x28] sm:$0xf]
      %v580 = vld [vmem:[#allocation2 + $0x2c] sm:$0x1]
      %v581 = vld [vmem:[#allocation2 + $0x30] sm:$0xf]
      %v582 = vld [vmem:[#allocation2 + $0x34] sm:$0xf]
      %v583 = vld [vmem:[#allocation2 + $0x38] sm:$0x1]
      %v584 = vld [vmem:[#allocation2 + $0x3c] sm:$0xf]
      %v585 = vld [vmem:[#allocation2 + $0x40] sm:$0xf]
      %v586 = vld [vmem:[#allocation2 + $0x44] sm:$0x1]
      %v587 = vld [vmem:[#allocation2 + $0x48] sm:$0xf]
      %v608 = vunpack.c.l.s4 1966171168
      %v609 = vunpack.c.0.s8 %v608
      %v610 = vlaneseq
      %v611 = vshrl.u32 %v610, 7
      %v612 = vsub.s32 %v609, %v611
      %v613 = vrot.slane %v569, %v612
      %v614 = vcombine.high %v613, %v613
      %v616 = vunpack.c.l.s4 1966171168
      %v617 = vunpack.c.0.s8 %v616
      %v618 = vlaneseq
      %v619 = vshrl.u32 %v618, 7
      %v620 = vsub.s32 %v617, %v619
      %v621 = vrot.slane %v613, %v620
      %v623 = vunpack.c.l.s4 1966171168
      %v624 = vunpack.c.0.s8 %v623
      %v625 = vlaneseq
      %v626 = vshrl.u32 %v625, 7
      %v627 = vsub.s32 %v624, %v626
      %v628 = vrot.slane %v614, %v627
      %v629 = vcombine.high %v621, %v621
      %v630 = vcombine.high %v628, %v628
      %v632 = vunpack.c.l.s4 1966171168
      %v633 = vunpack.c.0.s8 %v632
      %v634 = vlaneseq
      %v635 = vshrl.u32 %v634, 7
      %v636 = vsub.s32 %v633, %v635
      %v637 = vrot.slane %v570, %v636
      %v638 = vcombine.high %v637, %v637
      %v640 = vunpack.c.l.s4 1966171168
      %v641 = vunpack.c.0.s8 %v640
      %v642 = vlaneseq
      %v643 = vshrl.u32 %v642, 7
      %v644 = vsub.s32 %v641, %v643
      %v645 = vrot.slane %v637, %v644
      %v647 = vunpack.c.l.s4 1966171168
      %v648 = vunpack.c.0.s8 %v647
      %v649 = vlaneseq
      %v650 = vshrl.u32 %v649, 7
      %v651 = vsub.s32 %v648, %v650
      %v652 = vrot.slane %v638, %v651
      %v653 = vcombine.high %v645, %v645
      %v654 = vcombine.high %v652, %v652
      %v656 = vunpack.c.l.s4 1966171168
      %v657 = vunpack.c.0.s8 %v656
      %v658 = vlaneseq
      %v659 = vshrl.u32 %v658, 7
      %v660 = vsub.s32 %v657, %v659
      %v661 = vrot.slane %v571, %v660
      %v663 = vunpack.c.l.s4 1966171168
      %v664 = vunpack.c.0.s8 %v663
      %v665 = vlaneseq
      %v666 = vshrl.u32 %v665, 7
      %v667 = vsub.s32 %v664, %v666
      %v668 = vrot.slane %v661, %v667
      %v670 = vunpack.c.l.s4 1966171168
      %v671 = vunpack.c.0.s8 %v670
      %v672 = vlaneseq
      %v673 = vshrl.u32 %v672, 7
      %v674 = vsub.s32 %v671, %v673
      %v675 = vrot.slane %v572, %v674
      %v676 = vcombine.high %v675, %v675
      %v678 = vunpack.c.l.s4 1966171168
      %v679 = vunpack.c.0.s8 %v678
      %v680 = vlaneseq
      %v681 = vshrl.u32 %v680, 7
      %v682 = vsub.s32 %v679, %v681
      %v683 = vrot.slane %v675, %v682
      %v685 = vunpack.c.l.s4 1966171168
      %v686 = vunpack.c.0.s8 %v685
      %v687 = vlaneseq
      %v688 = vshrl.u32 %v687, 7
      %v689 = vsub.s32 %v686, %v688
      %v690 = vrot.slane %v676, %v689
      %v691 = vcombine.high %v683, %v683
      %v692 = vcombine.high %v690, %v690
      %v694 = vunpack.c.l.s4 1966171168
      %v695 = vunpack.c.0.s8 %v694
      %v696 = vlaneseq
      %v697 = vshrl.u32 %v696, 7
      %v698 = vsub.s32 %v695, %v697
      %v699 = vrot.slane %v573, %v698
      %v700 = vcombine.high %v699, %v699
      %v702 = vunpack.c.l.s4 1966171168
      %v703 = vunpack.c.0.s8 %v702
      %v704 = vlaneseq
      %v705 = vshrl.u32 %v704, 7
      %v706 = vsub.s32 %v703, %v705
      %v707 = vrot.slane %v699, %v706
      %v709 = vunpack.c.l.s4 1966171168
      %v710 = vunpack.c.0.s8 %v709
      %v711 = vlaneseq
      %v712 = vshrl.u32 %v711, 7
      %v713 = vsub.s32 %v710, %v712
      %v714 = vrot.slane %v700, %v713
      %v715 = vcombine.high %v707, %v707
      %v716 = vcombine.high %v714, %v714
      %v718 = vunpack.c.l.s4 1966171168
      %v719 = vunpack.c.0.s8 %v718
      %v720 = vlaneseq
      %v721 = vshrl.u32 %v720, 7
      %v722 = vsub.s32 %v719, %v721
      %v723 = vrot.slane %v574, %v722
      %v725 = vunpack.c.l.s4 1966171168
      %v726 = vunpack.c.0.s8 %v725
      %v727 = vlaneseq
      %v728 = vshrl.u32 %v727, 7
      %v729 = vsub.s32 %v726, %v728
      %v730 = vrot.slane %v723, %v729
      %v732 = vunpack.c.l.s4 1966171168
      %v733 = vunpack.c.0.s8 %v732
      %v734 = vlaneseq
      %v735 = vshrl.u32 %v734, 7
      %v736 = vsub.s32 %v733, %v735
      %v737 = vrot.slane %v575, %v736
      %v738 = vcombine.high %v737, %v737
      %v740 = vunpack.c.l.s4 1966171168
      %v741 = vunpack.c.0.s8 %v740
      %v742 = vlaneseq
      %v743 = vshrl.u32 %v742, 7
      %v744 = vsub.s32 %v741, %v743
      %v745 = vrot.slane %v737, %v744
      %v747 = vunpack.c.l.s4 1966171168
      %v748 = vunpack.c.0.s8 %v747
      %v749 = vlaneseq
      %v750 = vshrl.u32 %v749, 7
      %v751 = vsub.s32 %v748, %v750
      %v752 = vrot.slane %v738, %v751
      %v753 = vcombine.high %v745, %v745
      %v754 = vcombine.high %v752, %v752
      %v756 = vunpack.c.l.s4 1966171168
      %v757 = vunpack.c.0.s8 %v756
      %v758 = vlaneseq
      %v759 = vshrl.u32 %v758, 7
      %v760 = vsub.s32 %v757, %v759
      %v761 = vrot.slane %v576, %v760
      %v762 = vcombine.high %v761, %v761
      %v764 = vunpack.c.l.s4 1966171168
      %v765 = vunpack.c.0.s8 %v764
      %v766 = vlaneseq
      %v767 = vshrl.u32 %v766, 7
      %v768 = vsub.s32 %v765, %v767
      %v769 = vrot.slane %v761, %v768
      %v771 = vunpack.c.l.s4 1966171168
      %v772 = vunpack.c.0.s8 %v771
      %v773 = vlaneseq
      %v774 = vshrl.u32 %v773, 7
      %v775 = vsub.s32 %v772, %v774
      %v776 = vrot.slane %v762, %v775
      %v777 = vcombine.high %v769, %v769
      %v778 = vcombine.high %v776, %v776
      %v780 = vunpack.c.l.s4 1966171168
      %v781 = vunpack.c.0.s8 %v780
      %v782 = vlaneseq
      %v783 = vshrl.u32 %v782, 7
      %v784 = vsub.s32 %v781, %v783
      %v785 = vrot.slane %v577, %v784
      %v787 = vunpack.c.l.s4 1966171168
      %v788 = vunpack.c.0.s8 %v787
      %v789 = vlaneseq
      %v790 = vshrl.u32 %v789, 7
      %v791 = vsub.s32 %v788, %v790
      %v792 = vrot.slane %v785, %v791
      %v794 = vunpack.c.l.s4 1966171168
      %v795 = vunpack.c.0.s8 %v794
      %v796 = vlaneseq
      %v797 = vshrl.u32 %v796, 7
      %v798 = vsub.s32 %v795, %v797
      %v799 = vrot.slane %v578, %v798
      %v800 = vcombine.high %v799, %v799
      %v802 = vunpack.c.l.s4 1966171168
      %v803 = vunpack.c.0.s8 %v802
      %v804 = vlaneseq
      %v805 = vshrl.u32 %v804, 7
      %v806 = vsub.s32 %v803, %v805
      %v807 = vrot.slane %v799, %v806
      %v809 = vunpack.c.l.s4 1966171168
      %v810 = vunpack.c.0.s8 %v809
      %v811 = vlaneseq
      %v812 = vshrl.u32 %v811, 7
      %v813 = vsub.s32 %v810, %v812
      %v814 = vrot.slane %v800, %v813
      %v815 = vcombine.high %v807, %v807
      %v816 = vcombine.high %v814, %v814
      %v818 = vunpack.c.l.s4 1966171168
      %v819 = vunpack.c.0.s8 %v818
      %v820 = vlaneseq
      %v821 = vshrl.u32 %v820, 7
      %v822 = vsub.s32 %v819, %v821
      %v823 = vrot.slane %v579, %v822
      %v824 = vcombine.high %v823, %v823
      %v826 = vunpack.c.l.s4 1966171168
      %v827 = vunpack.c.0.s8 %v826
      %v828 = vlaneseq
      %v829 = vshrl.u32 %v828, 7
      %v830 = vsub.s32 %v827, %v829
      %v831 = vrot.slane %v823, %v830
      %v833 = vunpack.c.l.s4 1966171168
      %v834 = vunpack.c.0.s8 %v833
      %v835 = vlaneseq
      %v836 = vshrl.u32 %v835, 7
      %v837 = vsub.s32 %v834, %v836
      %v838 = vrot.slane %v824, %v837
      %v839 = vcombine.high %v831, %v831
      %v840 = vcombine.high %v838, %v838
      %v842 = vunpack.c.l.s4 1966171168
      %v843 = vunpack.c.0.s8 %v842
      %v844 = vlaneseq
      %v845 = vshrl.u32 %v844, 7
      %v846 = vsub.s32 %v843, %v845
      %v847 = vrot.slane %v580, %v846
      %v849 = vunpack.c.l.s4 1966171168
      %v850 = vunpack.c.0.s8 %v849
      %v851 = vlaneseq
      %v852 = vshrl.u32 %v851, 7
      %v853 = vsub.s32 %v850, %v852
      %v854 = vrot.slane %v847, %v853
      %v856 = vunpack.c.l.s4 1966171168
      %v857 = vunpack.c.0.s8 %v856
      %v858 = vlaneseq
      %v859 = vshrl.u32 %v858, 7
      %v860 = vsub.s32 %v857, %v859
      %v861 = vrot.slane %v581, %v860
      %v862 = vcombine.high %v861, %v861
      %v864 = vunpack.c.l.s4 1966171168
      %v865 = vunpack.c.0.s8 %v864
      %v866 = vlaneseq
      %v867 = vshrl.u32 %v866, 7
      %v868 = vsub.s32 %v865, %v867
      %v869 = vrot.slane %v861, %v868
      %v871 = vunpack.c.l.s4 1966171168
      %v872 = vunpack.c.0.s8 %v871
      %v873 = vlaneseq
      %v874 = vshrl.u32 %v873, 7
      %v875 = vsub.s32 %v872, %v874
      %v876 = vrot.slane %v862, %v875
      %v877 = vcombine.high %v869, %v869
      %v878 = vcombine.high %v876, %v876
      %v880 = vunpack.c.l.s4 1966171168
      %v881 = vunpack.c.0.s8 %v880
      %v882 = vlaneseq
      %v883 = vshrl.u32 %v882, 7
      %v884 = vsub.s32 %v881, %v883
      %v885 = vrot.slane %v582, %v884
      %v886 = vcombine.high %v885, %v885
      %v888 = vunpack.c.l.s4 1966171168
      %v889 = vunpack.c.0.s8 %v888
      %v890 = vlaneseq
      %v891 = vshrl.u32 %v890, 7
      %v892 = vsub.s32 %v889, %v891
      %v893 = vrot.slane %v885, %v892
      %v895 = vunpack.c.l.s4 1966171168
      %v896 = vunpack.c.0.s8 %v895
      %v897 = vlaneseq
      %v898 = vshrl.u32 %v897, 7
      %v899 = vsub.s32 %v896, %v898
      %v900 = vrot.slane %v886, %v899
      %v901 = vcombine.high %v893, %v893
      %v902 = vcombine.high %v900, %v900
      %v904 = vunpack.c.l.s4 1966171168
      %v905 = vunpack.c.0.s8 %v904
      %v906 = vlaneseq
      %v907 = vshrl.u32 %v906, 7
      %v908 = vsub.s32 %v905, %v907
      %v909 = vrot.slane %v583, %v908
      %v911 = vunpack.c.l.s4 1966171168
      %v912 = vunpack.c.0.s8 %v911
      %v913 = vlaneseq
      %v914 = vshrl.u32 %v913, 7
      %v915 = vsub.s32 %v912, %v914
      %v916 = vrot.slane %v909, %v915
      %v918 = vunpack.c.l.s4 1966171168
      %v919 = vunpack.c.0.s8 %v918
      %v920 = vlaneseq
      %v921 = vshrl.u32 %v920, 7
      %v922 = vsub.s32 %v919, %v921
      %v923 = vrot.slane %v584, %v922
      %v924 = vcombine.high %v923, %v923
      %v926 = vunpack.c.l.s4 1966171168
      %v927 = vunpack.c.0.s8 %v926
      %v928 = vlaneseq
      %v929 = vshrl.u32 %v928, 7
      %v930 = vsub.s32 %v927, %v929
      %v931 = vrot.slane %v923, %v930
      %v933 = vunpack.c.l.s4 1966171168
      %v934 = vunpack.c.0.s8 %v933
      %v935 = vlaneseq
      %v936 = vshrl.u32 %v935, 7
      %v937 = vsub.s32 %v934, %v936
      %v938 = vrot.slane %v924, %v937
      %v939 = vcombine.high %v931, %v931
      %v940 = vcombine.high %v938, %v938
      %v942 = vunpack.c.l.s4 1966171168
      %v943 = vunpack.c.0.s8 %v942
      %v944 = vlaneseq
      %v945 = vshrl.u32 %v944, 7
      %v946 = vsub.s32 %v943, %v945
      %v947 = vrot.slane %v585, %v946
      %v948 = vcombine.high %v947, %v947
      %v950 = vunpack.c.l.s4 1966171168
      %v951 = vunpack.c.0.s8 %v950
      %v952 = vlaneseq
      %v953 = vshrl.u32 %v952, 7
      %v954 = vsub.s32 %v951, %v953
      %v955 = vrot.slane %v947, %v954
      %v957 = vunpack.c.l.s4 1966171168
      %v958 = vunpack.c.0.s8 %v957
      %v959 = vlaneseq
      %v960 = vshrl.u32 %v959, 7
      %v961 = vsub.s32 %v958, %v960
      %v962 = vrot.slane %v948, %v961
      %v963 = vcombine.high %v955, %v955
      %v964 = vcombine.high %v962, %v962
      %v966 = vunpack.c.l.s4 1966171168
      %v967 = vunpack.c.0.s8 %v966
      %v968 = vlaneseq
      %v969 = vshrl.u32 %v968, 7
      %v970 = vsub.s32 %v967, %v969
      %v971 = vrot.slane %v586, %v970
      %v973 = vunpack.c.l.s4 1966171168
      %v974 = vunpack.c.0.s8 %v973
      %v975 = vlaneseq
      %v976 = vshrl.u32 %v975, 7
      %v977 = vsub.s32 %v974, %v976
      %v978 = vrot.slane %v971, %v977
      %v980 = vunpack.c.l.s4 1966171168
      %v981 = vunpack.c.0.s8 %v980
      %v982 = vlaneseq
      %v983 = vshrl.u32 %v982, 7
      %v984 = vsub.s32 %v981, %v983
      %v985 = vrot.slane %v587, %v984
      %v987 = vunpack.c.l.s4 1966171168
      %v988 = vunpack.c.0.s8 %v987
      %v989 = vlaneseq
      %v990 = vshrl.u32 %v989, 7
      %v991 = vsub.s32 %v988, %v990
      %v992 = vrot.slane %v985, %v991
      %v993 = vld [vmem:[%s2] sm:$0x3]
      %s994 = scalar_lea.vmem %s2, 2
      %v995 = vld [vmem:[%s994] sm:$0x3]
      %v996 = vcombine.low %v621, %v628
      %v997 = vcombine.low %v629, %v630
      %v998 = vcombine.low %v645, %v652
      %v999 = vcombine.low %v653, %v654
      %v1001 = vunpack.c.l.s4 1966171168
      %v1002 = vunpack.c.0.s8 %v1001
      %v1003 = vlaneseq
      %v1004 = vshrl.u32 %v1003, 7
      %v1005 = vsub.s32 %v1002, %v1004
      %v1006 = vrot.slane %v996, %v1005
      %v1008 = vunpack.c.l.s4 1966171168
      %v1009 = vunpack.c.0.s8 %v1008
      %v1010 = vlaneseq
      %v1011 = vshrl.u32 %v1010, 7
      %v1012 = vsub.s32 %v1009, %v1011
      %v1013 = vrot.slane %v997, %v1012
      %v1015 = vunpack.c.l.s4 1966171168
      %v1016 = vunpack.c.0.s8 %v1015
      %v1017 = vlaneseq
      %v1018 = vshrl.u32 %v1017, 7
      %v1019 = vsub.s32 %v1016, %v1018
      %v1020 = vrot.slane %v998, %v1019
      %v1022 = vunpack.c.l.s4 1966171168
      %v1023 = vunpack.c.0.s8 %v1022
      %v1024 = vlaneseq
      %v1025 = vshrl.u32 %v1024, 7
      %v1026 = vsub.s32 %v1023, %v1025
      %v1027 = vrot.slane %v999, %v1026
      %v1028 = vcombine.low %v1006, %v1013
      %v1029 = vcombine.low %v1020, %v1027
      %v1031 = vunpack.c.l.s4 1966171168
      %v1032 = vunpack.c.0.s8 %v1031
      %v1033 = vlaneseq
      %v1034 = vshrl.u32 %v1033, 7
      %v1035 = vsub.s32 %v1032, %v1034
      %v1036 = vrot.slane %v1028, %v1035
      %v1038 = vunpack.c.l.s4 1966171168
      %v1039 = vunpack.c.0.s8 %v1038
      %v1040 = vlaneseq
      %v1041 = vshrl.u32 %v1040, 7
      %v1042 = vsub.s32 %v1039, %v1041
      %v1043 = vrot.slane %v1029, %v1042
      %v1044 = vcombine.low %v1036, %v1043
      %v1045 = vcombine.low %v668, %v683
      %v1046 = vcombine.low %v690, %v691
      %v1047 = vcombine.low %v692, %v707
      %v1048 = vcombine.low %v714, %v715
      %v1050 = vunpack.c.l.s4 1966171168
      %v1051 = vunpack.c.0.s8 %v1050
      %v1052 = vlaneseq
      %v1053 = vshrl.u32 %v1052, 7
      %v1054 = vsub.s32 %v1051, %v1053
      %v1055 = vrot.slane %v1045, %v1054
      %v1057 = vunpack.c.l.s4 1966171168
      %v1058 = vunpack.c.0.s8 %v1057
      %v1059 = vlaneseq
      %v1060 = vshrl.u32 %v1059, 7
      %v1061 = vsub.s32 %v1058, %v1060
      %v1062 = vrot.slane %v1046, %v1061
      %v1064 = vunpack.c.l.s4 1966171168
      %v1065 = vunpack.c.0.s8 %v1064
      %v1066 = vlaneseq
      %v1067 = vshrl.u32 %v1066, 7
      %v1068 = vsub.s32 %v1065, %v1067
      %v1069 = vrot.slane %v1047, %v1068
      %v1071 = vunpack.c.l.s4 1966171168
      %v1072 = vunpack.c.0.s8 %v1071
      %v1073 = vlaneseq
      %v1074 = vshrl.u32 %v1073, 7
      %v1075 = vsub.s32 %v1072, %v1074
      %v1076 = vrot.slane %v1048, %v1075
      %v1077 = vcombine.low %v1055, %v1062
      %v1078 = vcombine.low %v1069, %v1076
      %v1080 = vunpack.c.l.s4 1966171168
      %v1081 = vunpack.c.0.s8 %v1080
      %v1082 = vlaneseq
      %v1083 = vshrl.u32 %v1082, 7
      %v1084 = vsub.s32 %v1081, %v1083
      %v1085 = vrot.slane %v1077, %v1084
      %v1087 = vunpack.c.l.s4 1966171168
      %v1088 = vunpack.c.0.s8 %v1087
      %v1089 = vlaneseq
      %v1090 = vshrl.u32 %v1089, 7
      %v1091 = vsub.s32 %v1088, %v1090
      %v1092 = vrot.slane %v1078, %v1091
      %v1093 = vcombine.low %v1085, %v1092
      %v1094 = vcombine.low %v716, %v730
      %v1095 = vcombine.low %v745, %v752
      %v1096 = vcombine.low %v753, %v754
      %v1097 = vcombine.low %v769, %v776
      %v1099 = vunpack.c.l.s4 1966171168
      %v1100 = vunpack.c.0.s8 %v1099
      %v1101 = vlaneseq
      %v1102 = vshrl.u32 %v1101, 7
      %v1103 = vsub.s32 %v1100, %v1102
      %v1104 = vrot.slane %v1094, %v1103
      %v1106 = vunpack.c.l.s4 1966171168
      %v1107 = vunpack.c.0.s8 %v1106
      %v1108 = vlaneseq
      %v1109 = vshrl.u32 %v1108, 7
      %v1110 = vsub.s32 %v1107, %v1109
      %v1111 = vrot.slane %v1095, %v1110
      %v1113 = vunpack.c.l.s4 1966171168
      %v1114 = vunpack.c.0.s8 %v1113
      %v1115 = vlaneseq
      %v1116 = vshrl.u32 %v1115, 7
      %v1117 = vsub.s32 %v1114, %v1116
      %v1118 = vrot.slane %v1096, %v1117
      %v1120 = vunpack.c.l.s4 1966171168
      %v1121 = vunpack.c.0.s8 %v1120
      %v1122 = vlaneseq
      %v1123 = vshrl.u32 %v1122, 7
      %v1124 = vsub.s32 %v1121, %v1123
      %v1125 = vrot.slane %v1097, %v1124
      %v1126 = vcombine.low %v1104, %v1111
      %v1127 = vcombine.low %v1118, %v1125
      %v1129 = vunpack.c.l.s4 1966171168
      %v1130 = vunpack.c.0.s8 %v1129
      %v1131 = vlaneseq
      %v1132 = vshrl.u32 %v1131, 7
      %v1133 = vsub.s32 %v1130, %v1132
      %v1134 = vrot.slane %v1126, %v1133
      %v1136 = vunpack.c.l.s4 1966171168
      %v1137 = vunpack.c.0.s8 %v1136
      %v1138 = vlaneseq
      %v1139 = vshrl.u32 %v1138, 7
      %v1140 = vsub.s32 %v1137, %v1139
      %v1141 = vrot.slane %v1127, %v1140
      %v1142 = vcombine.low %v1134, %v1141
      %v1143 = vcombine.low %v777, %v778
      %v1144 = vcombine.low %v792, %v807
      %v1145 = vcombine.low %v814, %v815
      %v1146 = vcombine.low %v816, %v831
      %v1148 = vunpack.c.l.s4 1966171168
      %v1149 = vunpack.c.0.s8 %v1148
      %v1150 = vlaneseq
      %v1151 = vshrl.u32 %v1150, 7
      %v1152 = vsub.s32 %v1149, %v1151
      %v1153 = vrot.slane %v1143, %v1152
      %v1155 = vunpack.c.l.s4 1966171168
      %v1156 = vunpack.c.0.s8 %v1155
      %v1157 = vlaneseq
      %v1158 = vshrl.u32 %v1157, 7
      %v1159 = vsub.s32 %v1156, %v1158
      %v1160 = vrot.slane %v1144, %v1159
      %v1162 = vunpack.c.l.s4 1966171168
      %v1163 = vunpack.c.0.s8 %v1162
      %v1164 = vlaneseq
      %v1165 = vshrl.u32 %v1164, 7
      %v1166 = vsub.s32 %v1163, %v1165
      %v1167 = vrot.slane %v1145, %v1166
      %v1169 = vunpack.c.l.s4 1966171168
      %v1170 = vunpack.c.0.s8 %v1169
      %v1171 = vlaneseq
      %v1172 = vshrl.u32 %v1171, 7
      %v1173 = vsub.s32 %v1170, %v1172
      %v1174 = vrot.slane %v1146, %v1173
      %v1175 = vcombine.low %v1153, %v1160
      %v1176 = vcombine.low %v1167, %v1174
      %v1178 = vunpack.c.l.s4 1966171168
      %v1179 = vunpack.c.0.s8 %v1178
      %v1180 = vlaneseq
      %v1181 = vshrl.u32 %v1180, 7
      %v1182 = vsub.s32 %v1179, %v1181
      %v1183 = vrot.slane %v1175, %v1182
      %v1185 = vunpack.c.l.s4 1966171168
      %v1186 = vunpack.c.0.s8 %v1185
      %v1187 = vlaneseq
      %v1188 = vshrl.u32 %v1187, 7
      %v1189 = vsub.s32 %v1186, %v1188
      %v1190 = vrot.slane %v1176, %v1189
      %v1191 = vcombine.low %v1183, %v1190
      %v1192 = vcombine.low %v838, %v839
      %v1193 = vcombine.low %v840, %v854
      %v1195 = vunpack.c.l.s4 1966171168
      %v1196 = vunpack.c.0.s8 %v1195
      %v1197 = vlaneseq
      %v1198 = vshrl.u32 %v1197, 7
      %v1199 = vsub.s32 %v1196, %v1198
      %v1200 = vrot.slane %v1192, %v1199
      %v1202 = vunpack.c.l.s4 1966171168
      %v1203 = vunpack.c.0.s8 %v1202
      %v1204 = vlaneseq
      %v1205 = vshrl.u32 %v1204, 7
      %v1206 = vsub.s32 %v1203, %v1205
      %v1207 = vrot.slane %v1193, %v1206
      %v1209 = vunpack.c.l.s4 1966171168
      %v1210 = vunpack.c.0.s8 %v1209
      %v1211 = vlaneseq
      %v1212 = vshrl.u32 %v1211, 7
      %v1213 = vsub.s32 %v1210, %v1212
      %v1214 = vrot.slane %v869, %v1213
      %v1215 = vcombine.low %v1200, %v1207
      %v1217 = vunpack.c.l.s4 1966171168
      %v1218 = vunpack.c.0.s8 %v1217
      %v1219 = vlaneseq
      %v1220 = vshrl.u32 %v1219, 7
      %v1221 = vsub.s32 %v1218, %v1220
      %v1222 = vrot.slane %v1215, %v1221
      %v1224 = vunpack.c.l.s4 1966171168
      %v1225 = vunpack.c.0.s8 %v1224
      %v1226 = vlaneseq
      %v1227 = vshrl.u32 %v1226, 7
      %v1228 = vsub.s32 %v1225, %v1227
      %v1229 = vrot.slane %v1214, %v1228
      %v1230 = vcombine.low %v1222, %v1229
      %vm1231 = vsmask.f32 7424
      %v1233 = vshrl.u32 %v1044, 16
      %v1235 = vshll.u32 %v1044, 16
      %v1237 = vrot.slane %v1235, 1
      %v1238 = vor.u32 %v1233, %v1237
      %v1240 = vshll.u32 %v1093, 16
      %v1242 = vrot.slane %v1240, 1
      %v1243 = vsel %vm1231, %v1238, %v1242
      %v1244 = vshrl.u32 %v1093, 16
      %v1246 = vor.u32 %v1244, %v1242
      %v1248 = vshll.u32 %v1142, 16
      %v1250 = vrot.slane %v1248, 1
      %v1251 = vsel %vm1231, %v1246, %v1250
      %v1252 = vshrl.u32 %v1142, 16
      %v1254 = vor.u32 %v1252, %v1250
      %v1256 = vshll.u32 %v1191, 16
      %v1258 = vrot.slane %v1256, 1
      %v1259 = vsel %vm1231, %v1254, %v1258
      %v1260 = vshrl.u32 %v1191, 16
      %v1262 = vor.u32 %v1260, %v1258
      %v1264 = vshll.u32 %v1230, 16
      %v1266 = vrot.slane %v1264, 1
      %v1267 = vsel %vm1231, %v1262, %v1266
      %v1268 = vshrl.u32 %v1230, 16
      %v1270 = vor.u32 %v1268, %v1266
      %vm1271 = vcmask 31744
      %v1273 = vsel %vm1271, %v1243, 0
      %v1276 = vsel %vm1271, %v1251, 0
      %v1279 = vsel %vm1271, %v1259, 0
      %v1282 = vsel %vm1271, %v1267, 0
      %v1285 = vsel %vm1271, %v1270, 0
      %vm1287 = vcmask 1041408
      %v1289 = vsel %vm1287, %v995, 0
      %1291 = vmatprep.subr.bf16.mxu0 0
      %1292 = vmatpush1.bf16.msra.mxu0 %v1289
      %1293 = vmatprep.subr.bf16.mxu0 0
      %1294 = vmatpush1.bf16.msra.mxu0 0
      %1295 = vmatprep.subr.bf16.mxu0 0
      %1296 = vmatpush1.bf16.msra.mxu0 0
      %1297 = vmatprep.subr.bf16.mxu0 0
      %1298 = vmatpush1.bf16.msra.mxu0 0
      %1299 = vmatprep.subr.bf16.mxu0 0
      %1300 = vmatpush1.bf16.msra.mxu0 0
      %1301 = vmatprep.subr.bf16.mxu0 0
      %1302 = vmatpush1.bf16.msra.mxu0 0
      %1303 = vmatprep.subr.bf16.mxu0 0
      %1304 = vmatpush1.bf16.msra.mxu0 0
      %1305 = vmatprep.subr.bf16.mxu0 0
      %1306 = vmatpush1.bf16.msra.mxu0 0
      %1307 = vmatprep.subr.bf16.mxu0 0
      %1308 = vmatpush1.bf16.msra.mxu0 0
      %1309 = vmatprep.subr.bf16.mxu0 0
      %1310 = vmatpush1.bf16.msra.mxu0 0
      %1311 = vmatprep.subr.bf16.mxu0 0
      %1312 = vmatpush1.bf16.msra.mxu0 0
      %1313 = vmatprep.subr.bf16.mxu0 0
      %1314 = vmatpush1.bf16.msra.mxu0 0
      %1315 = vmatprep.subr.bf16.mxu0 0
      %1316 = vmatpush1.bf16.msra.mxu0 0
      %1317 = vmatprep.subr.bf16.mxu0 0
      %1318 = vmatpush1.bf16.msra.mxu0 0
      %1319 = vmatprep.subr.bf16.mxu0 0
      %1320 = vmatpush1.bf16.msra.mxu0 0
      %1321 = vmatprep.subr.bf16.mxu0 0
      %1322 = vmatpush1.bf16.msra.mxu0 0
      %1323 = vmatprep.mubr.bf16.mxu0 0
      %1324 = vmatmul.mubr.bf16.gmra.mrb[0].mxu0 %v1273
      %v1325 = vpop.f32.mrb[0].mxu0
      %v1326 = vadd.f32 0.0, %v1325
      %v1327 = vpop.f32.mrb[0].mxu0
      %v1328 = vpop.f32.mrb[0].mxu0
      %v1329 = vadd.f32 0.0, %v1328
      %v1330 = vpop.f32.mrb[0].mxu0
      %1331 = vmatprep.mubr.bf16.mxu0 0
      %1332 = vmatmul.mubr.bf16.gmra.mrb[0].mxu0 %v1276
      %v1333 = vpop.f32.mrb[0].mxu0
      %v1334 = vadd.f32 0.0, %v1333
      %v1335 = vpop.f32.mrb[0].mxu0
      %v1336 = vpop.f32.mrb[0].mxu0
      %v1337 = vadd.f32 0.0, %v1336
      %v1338 = vpop.f32.mrb[0].mxu0
      %1339 = vmatprep.mubr.bf16.mxu0 0
      %1340 = vmatmul.mubr.bf16.gmra.mrb[0].mxu0 %v1279
      %v1341 = vpop.f32.mrb[0].mxu0
      %v1342 = vadd.f32 0.0, %v1341
      %v1343 = vpop.f32.mrb[0].mxu0
      %v1344 = vpop.f32.mrb[0].mxu0
      %v1345 = vadd.f32 0.0, %v1344
      %v1346 = vpop.f32.mrb[0].mxu0
      %1347 = vmatprep.mubr.bf16.mxu0 0
      %1348 = vmatmul.mubr.bf16.gmra.mrb[0].mxu0 %v1282
      %v1349 = vpop.f32.mrb[0].mxu0
      %v1350 = vadd.f32 0.0, %v1349
      %v1351 = vpop.f32.mrb[0].mxu0
      %v1352 = vpop.f32.mrb[0].mxu0
      %v1353 = vadd.f32 0.0, %v1352
      %v1354 = vpop.f32.mrb[0].mxu0
      %1355 = vmatprep.mubr.bf16.mxu0 0
      %1356 = vmatmul.mubr.bf16.gmra.mrb[0].mxu0 %v1285
      %v1357 = vpop.f32.mrb[0].mxu0
      %v1358 = vadd.f32 0.0, %v1357
      %v1359 = vpop.f32.mrb[0].mxu0
      %v1360 = vpop.f32.mrb[0].mxu0
      %v1361 = vpop.f32.mrb[0].mxu0
      %1362 = vdwg.mxu0
      %v1363 = vsel %vm1271, %v1044, 0
      %v1365 = vsel %vm1271, %v1093, 0
      %v1367 = vsel %vm1271, %v1142, 0
      %v1369 = vsel %vm1271, %v1191, 0
      %v1372 = vsel %vm1271, %v1222, 0
      %v1375 = vsel %vm1287, %v993, 0
      %1377 = vmatprep.subr.bf16.mxu0 0
      %1378 = vmatpush1.bf16.msra.mxu0 %v1375
      %1379 = vmatprep.subr.bf16.mxu0 0
      %1380 = vmatpush1.bf16.msra.mxu0 0
      %1381 = vmatprep.subr.bf16.mxu0 0
      %1382 = vmatpush1.bf16.msra.mxu0 0
      %1383 = vmatprep.subr.bf16.mxu0 0
      %1384 = vmatpush1.bf16.msra.mxu0 0
      %1385 = vmatprep.subr.bf16.mxu0 0
      %1386 = vmatpush1.bf16.msra.mxu0 0
      %1387 = vmatprep.subr.bf16.mxu0 0
      %1388 = vmatpush1.bf16.msra.mxu0 0
      %1389 = vmatprep.subr.bf16.mxu0 0
      %1390 = vmatpush1.bf16.msra.mxu0 0
      %1391 = vmatprep.subr.bf16.mxu0 0
      %1392 = vmatpush1.bf16.msra.mxu0 0
      %1393 = vmatprep.subr.bf16.mxu0 0
      %1394 = vmatpush1.bf16.msra.mxu0 0
      %1395 = vmatprep.subr.bf16.mxu0 0
      %1396 = vmatpush1.bf16.msra.mxu0 0
      %1397 = vmatprep.subr.bf16.mxu0 0
      %1398 = vmatpush1.bf16.msra.mxu0 0
      %1399 = vmatprep.subr.bf16.mxu0 0
      %1400 = vmatpush1.bf16.msra.mxu0 0
      %1401 = vmatprep.subr.bf16.mxu0 0
      %1402 = vmatpush1.bf16.msra.mxu0 0
      %1403 = vmatprep.subr.bf16.mxu0 0
      %1404 = vmatpush1.bf16.msra.mxu0 0
      %1405 = vmatprep.subr.bf16.mxu0 0
      %1406 = vmatpush1.bf16.msra.mxu0 0
      %1407 = vmatprep.subr.bf16.mxu0 0
      %1408 = vmatpush1.bf16.msra.mxu0 0
      %1409 = vmatprep.mubr.bf16.mxu0 0
      %1410 = vmatmul.mubr.bf16.gmra.mrb[0].mxu0 %v1363
      %v1411 = vpop.f32.mrb[0].mxu0
      %v1412 = vadd.f32 %v1326, %v1411
      %v1413 = vpop.f32.mrb[0].mxu0
      %v1414 = vpop.f32.mrb[0].mxu0
      %v1415 = vadd.f32 %v1329, %v1414
      %v1416 = vpop.f32.mrb[0].mxu0
      %1417 = vmatprep.mubr.bf16.mxu0 0
      %1418 = vmatmul.mubr.bf16.gmra.mrb[0].mxu0 %v1365
      %v1419 = vpop.f32.mrb[0].mxu0
      %v1420 = vadd.f32 %v1334, %v1419
      %v1421 = vpop.f32.mrb[0].mxu0
      %v1422 = vpop.f32.mrb[0].mxu0
      %v1423 = vadd.f32 %v1337, %v1422
      %v1424 = vpop.f32.mrb[0].mxu0
      %1425 = vmatprep.mubr.bf16.mxu0 0
      %1426 = vmatmul.mubr.bf16.gmra.mrb[0].mxu0 %v1367
      %v1427 = vpop.f32.mrb[0].mxu0
      %v1428 = vadd.f32 %v1342, %v1427
      %v1429 = vpop.f32.mrb[0].mxu0
      %v1430 = vpop.f32.mrb[0].mxu0
      %v1431 = vadd.f32 %v1345, %v1430
      %v1432 = vpop.f32.mrb[0].mxu0
      %1433 = vmatprep.mubr.bf16.mxu0 0
      %1434 = vmatmul.mubr.bf16.gmra.mrb[0].mxu0 %v1369
      %v1435 = vpop.f32.mrb[0].mxu0
      %v1436 = vadd.f32 %v1350, %v1435
      %v1437 = vpop.f32.mrb[0].mxu0
      %v1438 = vpop.f32.mrb[0].mxu0
      %v1439 = vadd.f32 %v1353, %v1438
      %v1440 = vpop.f32.mrb[0].mxu0
      %1441 = vmatprep.mubr.bf16.mxu0 0
      %1442 = vmatmul.mubr.bf16.gmra.mrb[0].mxu0 %v1372
      %v1443 = vpop.f32.mrb[0].mxu0
      %v1444 = vadd.f32 %v1358, %v1443
      %v1445 = vpop.f32.mrb[0].mxu0
      %v1446 = vpop.f32.mrb[0].mxu0
      %v1447 = vpop.f32.mrb[0].mxu0
      %1448 = vdwg.mxu0
      %s1449 = scalar_lea.vmem %s2, 4
      %v1450 = vld [vmem:[%s1449] sm:$0x3]
      %v1451 = vcombine.low %v628, %v629
      %v1452 = vcombine.low %v630, %v645
      %v1453 = vcombine.low %v652, %v653
      %v1454 = vcombine.low %v654, %v668
      %v1456 = vunpack.c.l.s4 1966171168
      %v1457 = vunpack.c.0.s8 %v1456
      %v1458 = vlaneseq
      %v1459 = vshrl.u32 %v1458, 7
      %v1460 = vsub.s32 %v1457, %v1459
      %v1461 = vrot.slane %v1451, %v1460
      %v1463 = vunpack.c.l.s4 1966171168
      %v1464 = vunpack.c.0.s8 %v1463
      %v1465 = vlaneseq
      %v1466 = vshrl.u32 %v1465, 7
      %v1467 = vsub.s32 %v1464, %v1466
      %v1468 = vrot.slane %v1452, %v1467
      %v1470 = vunpack.c.l.s4 1966171168
      %v1471 = vunpack.c.0.s8 %v1470
      %v1472 = vlaneseq
      %v1473 = vshrl.u32 %v1472, 7
      %v1474 = vsub.s32 %v1471, %v1473
      %v1475 = vrot.slane %v1453, %v1474
      %v1477 = vunpack.c.l.s4 1966171168
      %v1478 = vunpack.c.0.s8 %v1477
      %v1479 = vlaneseq
      %v1480 = vshrl.u32 %v1479, 7
      %v1481 = vsub.s32 %v1478, %v1480
      %v1482 = vrot.slane %v1454, %v1481
      %v1483 = vcombine.low %v1461, %v1468
      %v1484 = vcombine.low %v1475, %v1482
      %v1486 = vunpack.c.l.s4 1966171168
      %v1487 = vunpack.c.0.s8 %v1486
      %v1488 = vlaneseq
      %v1489 = vshrl.u32 %v1488, 7
      %v1490 = vsub.s32 %v1487, %v1489
      %v1491 = vrot.slane %v1483, %v1490
      %v1493 = vunpack.c.l.s4 1966171168
      %v1494 = vunpack.c.0.s8 %v1493
      %v1495 = vlaneseq
      %v1496 = vshrl.u32 %v1495, 7
      %v1497 = vsub.s32 %v1494, %v1496
      %v1498 = vrot.slane %v1484, %v1497
      %v1499 = vcombine.low %v1491, %v1498
      %v1500 = vcombine.low %v683, %v690
      %v1501 = vcombine.low %v691, %v692
      %v1502 = vcombine.low %v707, %v714
      %v1503 = vcombine.low %v715, %v716
      %v1505 = vunpack.c.l.s4 1966171168
      %v1506 = vunpack.c.0.s8 %v1505
      %v1507 = vlaneseq
      %v1508 = vshrl.u32 %v1507, 7
      %v1509 = vsub.s32 %v1506, %v1508
      %v1510 = vrot.slane %v1500, %v1509
      %v1512 = vunpack.c.l.s4 1966171168
      %v1513 = vunpack.c.0.s8 %v1512
      %v1514 = vlaneseq
      %v1515 = vshrl.u32 %v1514, 7
      %v1516 = vsub.s32 %v1513, %v1515
      %v1517 = vrot.slane %v1501, %v1516
      %v1519 = vunpack.c.l.s4 1966171168
      %v1520 = vunpack.c.0.s8 %v1519
      %v1521 = vlaneseq
      %v1522 = vshrl.u32 %v1521, 7
      %v1523 = vsub.s32 %v1520, %v1522
      %v1524 = vrot.slane %v1502, %v1523
      %v1526 = vunpack.c.l.s4 1966171168
      %v1527 = vunpack.c.0.s8 %v1526
      %v1528 = vlaneseq
      %v1529 = vshrl.u32 %v1528, 7
      %v1530 = vsub.s32 %v1527, %v1529
      %v1531 = vrot.slane %v1503, %v1530
      %v1532 = vcombine.low %v1510, %v1517
      %v1533 = vcombine.low %v1524, %v1531
      %v1535 = vunpack.c.l.s4 1966171168
      %v1536 = vunpack.c.0.s8 %v1535
      %v1537 = vlaneseq
      %v1538 = vshrl.u32 %v1537, 7
      %v1539 = vsub.s32 %v1536, %v1538
      %v1540 = vrot.slane %v1532, %v1539
      %v1542 = vunpack.c.l.s4 1966171168
      %v1543 = vunpack.c.0.s8 %v1542
      %v1544 = vlaneseq
      %v1545 = vshrl.u32 %v1544, 7
      %v1546 = vsub.s32 %v1543, %v1545
      %v1547 = vrot.slane %v1533, %v1546
      %v1548 = vcombine.low %v1540, %v1547
      %v1549 = vcombine.low %v730, %v745
      %v1550 = vcombine.low %v752, %v753
      %v1551 = vcombine.low %v754, %v769
      %v1552 = vcombine.low %v776, %v777
      %v1554 = vunpack.c.l.s4 1966171168
      %v1555 = vunpack.c.0.s8 %v1554
      %v1556 = vlaneseq
      %v1557 = vshrl.u32 %v1556, 7
      %v1558 = vsub.s32 %v1555, %v1557
      %v1559 = vrot.slane %v1549, %v1558
      %v1561 = vunpack.c.l.s4 1966171168
      %v1562 = vunpack.c.0.s8 %v1561
      %v1563 = vlaneseq
      %v1564 = vshrl.u32 %v1563, 7
      %v1565 = vsub.s32 %v1562, %v1564
      %v1566 = vrot.slane %v1550, %v1565
      %v1568 = vunpack.c.l.s4 1966171168
      %v1569 = vunpack.c.0.s8 %v1568
      %v1570 = vlaneseq
      %v1571 = vshrl.u32 %v1570, 7
      %v1572 = vsub.s32 %v1569, %v1571
      %v1573 = vrot.slane %v1551, %v1572
      %v1575 = vunpack.c.l.s4 1966171168
      %v1576 = vunpack.c.0.s8 %v1575
      %v1577 = vlaneseq
      %v1578 = vshrl.u32 %v1577, 7
      %v1579 = vsub.s32 %v1576, %v1578
      %v1580 = vrot.slane %v1552, %v1579
      %v1581 = vcombine.low %v1559, %v1566
      %v1582 = vcombine.low %v1573, %v1580
      %v1584 = vunpack.c.l.s4 1966171168
      %v1585 = vunpack.c.0.s8 %v1584
      %v1586 = vlaneseq
      %v1587 = vshrl.u32 %v1586, 7
      %v1588 = vsub.s32 %v1585, %v1587
      %v1589 = vrot.slane %v1581, %v1588
      %v1591 = vunpack.c.l.s4 1966171168
      %v1592 = vunpack.c.0.s8 %v1591
      %v1593 = vlaneseq
      %v1594 = vshrl.u32 %v1593, 7
      %v1595 = vsub.s32 %v1592, %v1594
      %v1596 = vrot.slane %v1582, %v1595
      %v1597 = vcombine.low %v1589, %v1596
      %v1598 = vcombine.low %v778, %v792
      %v1599 = vcombine.low %v807, %v814
      %v1600 = vcombine.low %v815, %v816
      %v1601 = vcombine.low %v831, %v838
      %v1603 = vunpack.c.l.s4 1966171168
      %v1604 = vunpack.c.0.s8 %v1603
      %v1605 = vlaneseq
      %v1606 = vshrl.u32 %v1605, 7
      %v1607 = vsub.s32 %v1604, %v1606
      %v1608 = vrot.slane %v1598, %v1607
      %v1610 = vunpack.c.l.s4 1966171168
      %v1611 = vunpack.c.0.s8 %v1610
      %v1612 = vlaneseq
      %v1613 = vshrl.u32 %v1612, 7
      %v1614 = vsub.s32 %v1611, %v1613
      %v1615 = vrot.slane %v1599, %v1614
      %v1617 = vunpack.c.l.s4 1966171168
      %v1618 = vunpack.c.0.s8 %v1617
      %v1619 = vlaneseq
      %v1620 = vshrl.u32 %v1619, 7
      %v1621 = vsub.s32 %v1618, %v1620
      %v1622 = vrot.slane %v1600, %v1621
      %v1624 = vunpack.c.l.s4 1966171168
      %v1625 = vunpack.c.0.s8 %v1624
      %v1626 = vlaneseq
      %v1627 = vshrl.u32 %v1626, 7
      %v1628 = vsub.s32 %v1625, %v1627
      %v1629 = vrot.slane %v1601, %v1628
      %v1630 = vcombine.low %v1608, %v1615
      %v1631 = vcombine.low %v1622, %v1629
      %v1633 = vunpack.c.l.s4 1966171168
      %v1634 = vunpack.c.0.s8 %v1633
      %v1635 = vlaneseq
      %v1636 = vshrl.u32 %v1635, 7
      %v1637 = vsub.s32 %v1634, %v1636
      %v1638 = vrot.slane %v1630, %v1637
      %v1640 = vunpack.c.l.s4 1966171168
      %v1641 = vunpack.c.0.s8 %v1640
      %v1642 = vlaneseq
      %v1643 = vshrl.u32 %v1642, 7
      %v1644 = vsub.s32 %v1641, %v1643
      %v1645 = vrot.slane %v1631, %v1644
      %v1646 = vcombine.low %v1638, %v1645
      %v1647 = vcombine.low %v839, %v840
      %v1648 = vcombine.low %v854, %v869
      %v1650 = vunpack.c.l.s4 1966171168
      %v1651 = vunpack.c.0.s8 %v1650
      %v1652 = vlaneseq
      %v1653 = vshrl.u32 %v1652, 7
      %v1654 = vsub.s32 %v1651, %v1653
      %v1655 = vrot.slane %v1647, %v1654
      %v1657 = vunpack.c.l.s4 1966171168
      %v1658 = vunpack.c.0.s8 %v1657
      %v1659 = vlaneseq
      %v1660 = vshrl.u32 %v1659, 7
      %v1661 = vsub.s32 %v1658, %v1660
      %v1662 = vrot.slane %v1648, %v1661
      %v1663 = vcombine.low %v1655, %v1662
      %v1665 = vunpack.c.l.s4 1966171168
      %v1666 = vunpack.c.0.s8 %v1665
      %v1667 = vlaneseq
      %v1668 = vshrl.u32 %v1667, 7
      %v1669 = vsub.s32 %v1666, %v1668
      %v1670 = vrot.slane %v1663, %v1669
      %v1672 = vsel %vm1271, %v1499, 0
      %v1675 = vsel %vm1271, %v1548, 0
      %v1678 = vsel %vm1271, %v1597, 0
      %v1681 = vsel %vm1271, %v1646, 0
      %v1684 = vsel %vm1271, %v1670, 0
      %v1687 = vsel %vm1287, %v1450, 0
      %1689 = vmatprep.subr.bf16.mxu0 0
      %1690 = vmatpush1.bf16.msra.mxu0 %v1687
      %1691 = vmatprep.subr.bf16.mxu0 0
      %1692 = vmatpush1.bf16.msra.mxu0 0
      %1693 = vmatprep.subr.bf16.mxu0 0
      %1694 = vmatpush1.bf16.msra.mxu0 0
      %1695 = vmatprep.subr.bf16.mxu0 0
      %1696 = vmatpush1.bf16.msra.mxu0 0
      %1697 = vmatprep.subr.bf16.mxu0 0
      %1698 = vmatpush1.bf16.msra.mxu0 0
      %1699 = vmatprep.subr.bf16.mxu0 0
      %1700 = vmatpush1.bf16.msra.mxu0 0
      %1701 = vmatprep.subr.bf16.mxu0 0
      %1702 = vmatpush1.bf16.msra.mxu0 0
      %1703 = vmatprep.subr.bf16.mxu0 0
      %1704 = vmatpush1.bf16.msra.mxu0 0
      %1705 = vmatprep.subr.bf16.mxu0 0
      %1706 = vmatpush1.bf16.msra.mxu0 0
      %1707 = vmatprep.subr.bf16.mxu0 0
      %1708 = vmatpush1.bf16.msra.mxu0 0
      %1709 = vmatprep.subr.bf16.mxu0 0
      %1710 = vmatpush1.bf16.msra.mxu0 0
      %1711 = vmatprep.subr.bf16.mxu0 0
      %1712 = vmatpush1.bf16.msra.mxu0 0
      %1713 = vmatprep.subr.bf16.mxu0 0
      %1714 = vmatpush1.bf16.msra.mxu0 0
      %1715 = vmatprep.subr.bf16.mxu0 0
      %1716 = vmatpush1.bf16.msra.mxu0 0
      %1717 = vmatprep.subr.bf16.mxu0 0
      %1718 = vmatpush1.bf16.msra.mxu0 0
      %1719 = vmatprep.subr.bf16.mxu0 0
      %1720 = vmatpush1.bf16.msra.mxu0 0
      %1721 = vmatprep.mubr.bf16.mxu0 0
      %1722 = vmatmul.mubr.bf16.gmra.mrb[0].mxu0 %v1672
      %v1723 = vpop.f32.mrb[0].mxu0
      %v1724 = vadd.f32 0.0, %v1723
      %v1725 = vpop.f32.mrb[0].mxu0
      %v1726 = vpop.f32.mrb[0].mxu0
      %v1727 = vadd.f32 0.0, %v1726
      %v1728 = vpop.f32.mrb[0].mxu0
      %1729 = vmatprep.mubr.bf16.mxu0 0
      %1730 = vmatmul.mubr.bf16.gmra.mrb[0].mxu0 %v1675
      %v1731 = vpop.f32.mrb[0].mxu0
      %v1732 = vadd.f32 0.0, %v1731
      %v1733 = vpop.f32.mrb[0].mxu0
      %v1734 = vpop.f32.mrb[0].mxu0
      %v1735 = vadd.f32 0.0, %v1734
      %v1736 = vpop.f32.mrb[0].mxu0
      %1737 = vmatprep.mubr.bf16.mxu0 0
      %1738 = vmatmul.mubr.bf16.gmra.mrb[0].mxu0 %v1678
      %v1739 = vpop.f32.mrb[0].mxu0
      %v1740 = vadd.f32 0.0, %v1739
      %v1741 = vpop.f32.mrb[0].mxu0
      %v1742 = vpop.f32.mrb[0].mxu0
      %v1743 = vadd.f32 0.0, %v1742
      %v1744 = vpop.f32.mrb[0].mxu0
      %1745 = vmatprep.mubr.bf16.mxu0 0
      %1746 = vmatmul.mubr.bf16.gmra.mrb[0].mxu0 %v1681
      %v1747 = vpop.f32.mrb[0].mxu0
      %v1748 = vadd.f32 0.0, %v1747
      %v1749 = vpop.f32.mrb[0].mxu0
      %v1750 = vpop.f32.mrb[0].mxu0
      %v1751 = vadd.f32 0.0, %v1750
      %v1752 = vpop.f32.mrb[0].mxu0
      %1753 = vmatprep.mubr.bf16.mxu0 0
      %1754 = vmatmul.mubr.bf16.gmra.mrb[0].mxu0 %v1684
      %v1755 = vpop.f32.mrb[0].mxu0
      %v1756 = vadd.f32 0.0, %v1755
      %v1757 = vpop.f32.mrb[0].mxu0
      %v1758 = vpop.f32.mrb[0].mxu0
      %v1759 = vpop.f32.mrb[0].mxu0
      %1760 = vdwg.mxu0
      %v1761 = vadd.f32 %v1412, %v1724
      %v1762 = vadd.f32 %v1415, %v1727
      %v1763 = vadd.f32 %v1420, %v1732
      %v1764 = vadd.f32 %v1423, %v1735
      %v1765 = vadd.f32 %v1428, %v1740
      %v1766 = vadd.f32 %v1431, %v1743
      %v1767 = vadd.f32 %v1436, %v1748
      %v1768 = vadd.f32 %v1439, %v1751
      %v1769 = vadd.f32 %v1444, %v1756
      %s1770 = scalar_lea.vmem %s2, 6
      %v1771 = vld [vmem:[%s1770] sm:$0x3]
      %v1772 = vcombine.low %v876, %v877
      %v1773 = vcombine.low %v878, %v893
      %v1775 = vunpack.c.l.s4 1966171168
      %v1776 = vunpack.c.0.s8 %v1775
      %v1777 = vlaneseq
      %v1778 = vshrl.u32 %v1777, 7
      %v1779 = vsub.s32 %v1776, %v1778
      %v1780 = vrot.slane %v1772, %v1779
      %v1782 = vunpack.c.l.s4 1966171168
      %v1783 = vunpack.c.0.s8 %v1782
      %v1784 = vlaneseq
      %v1785 = vshrl.u32 %v1784, 7
      %v1786 = vsub.s32 %v1783, %v1785
      %v1787 = vrot.slane %v1773, %v1786
      %v1788 = vcombine.low %v1780, %v1787
      %v1790 = vunpack.c.l.s4 1966171168
      %v1791 = vunpack.c.0.s8 %v1790
      %v1792 = vlaneseq
      %v1793 = vshrl.u32 %v1792, 7
      %v1794 = vsub.s32 %v1791, %v1793
      %v1795 = vrot.slane %v1788, %v1794
      %v1796 = vcombine.low %v1670, %v1795
      %v1797 = vcombine.low %v900, %v901
      %v1798 = vcombine.low %v902, %v916
      %v1800 = vunpack.c.l.s4 1966171168
      %v1801 = vunpack.c.0.s8 %v1800
      %v1802 = vlaneseq
      %v1803 = vshrl.u32 %v1802, 7
      %v1804 = vsub.s32 %v1801, %v1803
      %v1805 = vrot.slane %v1797, %v1804
      %v1807 = vunpack.c.l.s4 1966171168
      %v1808 = vunpack.c.0.s8 %v1807
      %v1809 = vlaneseq
      %v1810 = vshrl.u32 %v1809, 7
      %v1811 = vsub.s32 %v1808, %v1810
      %v1812 = vrot.slane %v1798, %v1811
      %v1813 = vcombine.low %v1805, %v1812
      %v1815 = vunpack.c.l.s4 1966171168
      %v1816 = vunpack.c.0.s8 %v1815
      %v1817 = vlaneseq
      %v1818 = vshrl.u32 %v1817, 7
      %v1819 = vsub.s32 %v1816, %v1818
      %v1820 = vrot.slane %v1813, %v1819
      %v1822 = vsel %vm1271, %v1796, 0
      %v1825 = vsel %vm1271, %v1820, 0
      %v1828 = vsel %vm1287, %v1771, 0
      %1830 = vmatprep.subr.bf16.mxu0 0
      %1831 = vmatpush1.bf16.msra.mxu0 %v1828
      %1832 = vmatprep.subr.bf16.mxu0 0
      %1833 = vmatpush1.bf16.msra.mxu0 0
      %1834 = vmatprep.subr.bf16.mxu0 0
      %1835 = vmatpush1.bf16.msra.mxu0 0
      %1836 = vmatprep.subr.bf16.mxu0 0
      %1837 = vmatpush1.bf16.msra.mxu0 0
      %1838 = vmatprep.subr.bf16.mxu0 0
      %1839 = vmatpush1.bf16.msra.mxu0 0
      %1840 = vmatprep.subr.bf16.mxu0 0
      %1841 = vmatpush1.bf16.msra.mxu0 0
      %1842 = vmatprep.subr.bf16.mxu0 0
      %1843 = vmatpush1.bf16.msra.mxu0 0
      %1844 = vmatprep.subr.bf16.mxu0 0
      %1845 = vmatpush1.bf16.msra.mxu0 0
      %1846 = vmatprep.subr.bf16.mxu0 0
      %1847 = vmatpush1.bf16.msra.mxu0 0
      %1848 = vmatprep.subr.bf16.mxu0 0
      %1849 = vmatpush1.bf16.msra.mxu0 0
      %1850 = vmatprep.subr.bf16.mxu0 0
      %1851 = vmatpush1.bf16.msra.mxu0 0
      %1852 = vmatprep.subr.bf16.mxu0 0
      %1853 = vmatpush1.bf16.msra.mxu0 0
      %1854 = vmatprep.subr.bf16.mxu0 0
      %1855 = vmatpush1.bf16.msra.mxu0 0
      %1856 = vmatprep.subr.bf16.mxu0 0
      %1857 = vmatpush1.bf16.msra.mxu0 0
      %1858 = vmatprep.subr.bf16.mxu0 0
      %1859 = vmatpush1.bf16.msra.mxu0 0
      %1860 = vmatprep.subr.bf16.mxu0 0
      %1861 = vmatpush1.bf16.msra.mxu0 0
      %1862 = vmatprep.mubr.bf16.mxu0 0
      %1863 = vmatmul.mubr.bf16.gmra.mrb[0].mxu0 %v1675
      %v1864 = vpop.f32.mrb[0].mxu0
      %v1865 = vadd.f32 0.0, %v1864
      %v1866 = vpop.f32.mrb[0].mxu0
      %v1867 = vpop.f32.mrb[0].mxu0
      %v1868 = vadd.f32 0.0, %v1867
      %v1869 = vpop.f32.mrb[0].mxu0
      %1870 = vmatprep.mubr.bf16.mxu0 0
      %1871 = vmatmul.mubr.bf16.gmra.mrb[0].mxu0 %v1678
      %v1872 = vpop.f32.mrb[0].mxu0
      %v1873 = vadd.f32 0.0, %v1872
      %v1874 = vpop.f32.mrb[0].mxu0
      %v1875 = vpop.f32.mrb[0].mxu0
      %v1876 = vadd.f32 0.0, %v1875
      %v1877 = vpop.f32.mrb[0].mxu0
      %1878 = vmatprep.mubr.bf16.mxu0 0
      %1879 = vmatmul.mubr.bf16.gmra.mrb[0].mxu0 %v1681
      %v1880 = vpop.f32.mrb[0].mxu0
      %v1881 = vadd.f32 0.0, %v1880
      %v1882 = vpop.f32.mrb[0].mxu0
      %v1883 = vpop.f32.mrb[0].mxu0
      %v1884 = vadd.f32 0.0, %v1883
      %v1885 = vpop.f32.mrb[0].mxu0
      %1886 = vmatprep.mubr.bf16.mxu0 0
      %1887 = vmatmul.mubr.bf16.gmra.mrb[0].mxu0 %v1822
      %v1888 = vpop.f32.mrb[0].mxu0
      %v1889 = vadd.f32 0.0, %v1888
      %v1890 = vpop.f32.mrb[0].mxu0
      %v1891 = vpop.f32.mrb[0].mxu0
      %v1892 = vadd.f32 0.0, %v1891
      %v1893 = vpop.f32.mrb[0].mxu0
      %1894 = vmatprep.mubr.bf16.mxu0 0
      %1895 = vmatmul.mubr.bf16.gmra.mrb[0].mxu0 %v1825
      %v1896 = vpop.f32.mrb[0].mxu0
      %v1897 = vadd.f32 0.0, %v1896
      %v1898 = vpop.f32.mrb[0].mxu0
      %v1899 = vpop.f32.mrb[0].mxu0
      %v1900 = vpop.f32.mrb[0].mxu0
      %1901 = vdwg.mxu0
      %v1902 = vadd.f32 %v1761, %v1865
      %v1903 = vadd.f32 %v1762, %v1868
      %v1904 = vadd.f32 %v1763, %v1873
      %v1905 = vadd.f32 %v1764, %v1876
      %v1906 = vadd.f32 %v1765, %v1881
      %v1907 = vadd.f32 %v1766, %v1884
      %v1908 = vadd.f32 %v1767, %v1889
      %v1909 = vadd.f32 %v1768, %v1892
      %v1910 = vadd.f32 %v1769, %v1897
      %s1911 = scalar_lea.vmem %s2, 8
      %v1912 = vld [vmem:[%s1911] sm:$0x3]
      %v1914 = vunpack.c.l.s4 1966171168
      %v1915 = vunpack.c.0.s8 %v1914
      %v1916 = vlaneseq
      %v1917 = vshrl.u32 %v1916, 7
      %v1918 = vsub.s32 %v1915, %v1917
      %v1919 = vrot.slane %v931, %v1918
      %v1921 = vunpack.c.l.s4 1966171168
      %v1922 = vunpack.c.0.s8 %v1921
      %v1923 = vlaneseq
      %v1924 = vshrl.u32 %v1923, 7
      %v1925 = vsub.s32 %v1922, %v1924
      %v1926 = vrot.slane %v1919, %v1925
      %v1927 = vcombine.low %v1820, %v1926
      %v1928 = vshrl.u32 %v1548, 16
      %v1930 = vshll.u32 %v1548, 16
      %v1932 = vrot.slane %v1930, 1
      %v1933 = vor.u32 %v1928, %v1932
      %v1934 = vshll.u32 %v1597, 16
      %v1936 = vrot.slane %v1934, 1
      %v1937 = vsel %vm1231, %v1933, %v1936
      %v1938 = vshrl.u32 %v1597, 16
      %v1940 = vor.u32 %v1938, %v1936
      %v1941 = vshll.u32 %v1646, 16
      %v1943 = vrot.slane %v1941, 1
      %v1944 = vsel %vm1231, %v1940, %v1943
      %v1945 = vshrl.u32 %v1646, 16
      %v1947 = vor.u32 %v1945, %v1943
      %v1948 = vshll.u32 %v1796, 16
      %v1950 = vrot.slane %v1948, 1
      %v1951 = vsel %vm1231, %v1947, %v1950
      %v1952 = vshrl.u32 %v1796, 16
      %v1954 = vor.u32 %v1952, %v1950
      %v1956 = vshll.u32 %v1927, 16
      %v1958 = vrot.slane %v1956, 1
      %v1959 = vsel %vm1231, %v1954, %v1958
      %v1960 = vshrl.u32 %v1927, 16
      %v1962 = vor.u32 %v1960, %v1958
      %v1964 = vsel %vm1271, %v1937, 0
      %v1967 = vsel %vm1271, %v1944, 0
      %v1970 = vsel %vm1271, %v1951, 0
      %v1973 = vsel %vm1271, %v1959, 0
      %v1976 = vsel %vm1271, %v1962, 0
      %v1979 = vsel %vm1287, %v1912, 0
      %1981 = vmatprep.subr.bf16.mxu0 0
      %1982 = vmatpush1.bf16.msra.mxu0 %v1979
      %1983 = vmatprep.subr.bf16.mxu0 0
      %1984 = vmatpush1.bf16.msra.mxu0 0
      %1985 = vmatprep.subr.bf16.mxu0 0
      %1986 = vmatpush1.bf16.msra.mxu0 0
      %1987 = vmatprep.subr.bf16.mxu0 0
      %1988 = vmatpush1.bf16.msra.mxu0 0
      %1989 = vmatprep.subr.bf16.mxu0 0
      %1990 = vmatpush1.bf16.msra.mxu0 0
      %1991 = vmatprep.subr.bf16.mxu0 0
      %1992 = vmatpush1.bf16.msra.mxu0 0
      %1993 = vmatprep.subr.bf16.mxu0 0
      %1994 = vmatpush1.bf16.msra.mxu0 0
      %1995 = vmatprep.subr.bf16.mxu0 0
      %1996 = vmatpush1.bf16.msra.mxu0 0
      %1997 = vmatprep.subr.bf16.mxu0 0
      %1998 = vmatpush1.bf16.msra.mxu0 0
      %1999 = vmatprep.subr.bf16.mxu0 0
      %2000 = vmatpush1.bf16.msra.mxu0 0
      %2001 = vmatprep.subr.bf16.mxu0 0
      %2002 = vmatpush1.bf16.msra.mxu0 0
      %2003 = vmatprep.subr.bf16.mxu0 0
      %2004 = vmatpush1.bf16.msra.mxu0 0
      %2005 = vmatprep.subr.bf16.mxu0 0
      %2006 = vmatpush1.bf16.msra.mxu0 0
      %2007 = vmatprep.subr.bf16.mxu0 0
      %2008 = vmatpush1.bf16.msra.mxu0 0
      %2009 = vmatprep.subr.bf16.mxu0 0
      %2010 = vmatpush1.bf16.msra.mxu0 0
      %2011 = vmatprep.subr.bf16.mxu0 0
      %2012 = vmatpush1.bf16.msra.mxu0 0
      %2013 = vmatprep.mubr.bf16.mxu0 0
      %2014 = vmatmul.mubr.bf16.gmra.mrb[0].mxu0 %v1964
      %v2015 = vpop.f32.mrb[0].mxu0
      %v2016 = vadd.f32 0.0, %v2015
      %v2017 = vpop.f32.mrb[0].mxu0
      %v2018 = vpop.f32.mrb[0].mxu0
      %v2019 = vadd.f32 0.0, %v2018
      %v2020 = vpop.f32.mrb[0].mxu0
      %2021 = vmatprep.mubr.bf16.mxu0 0
      %2022 = vmatmul.mubr.bf16.gmra.mrb[0].mxu0 %v1967
      %v2023 = vpop.f32.mrb[0].mxu0
      %v2024 = vadd.f32 0.0, %v2023
      %v2025 = vpop.f32.mrb[0].mxu0
      %v2026 = vpop.f32.mrb[0].mxu0
      %v2027 = vadd.f32 0.0, %v2026
      %v2028 = vpop.f32.mrb[0].mxu0
      %2029 = vmatprep.mubr.bf16.mxu0 0
      %2030 = vmatmul.mubr.bf16.gmra.mrb[0].mxu0 %v1970
      %v2031 = vpop.f32.mrb[0].mxu0
      %v2032 = vadd.f32 0.0, %v2031
      %v2033 = vpop.f32.mrb[0].mxu0
      %v2034 = vpop.f32.mrb[0].mxu0
      %v2035 = vadd.f32 0.0, %v2034
      %v2036 = vpop.f32.mrb[0].mxu0
      %2037 = vmatprep.mubr.bf16.mxu0 0
      %2038 = vmatmul.mubr.bf16.gmra.mrb[0].mxu0 %v1973
      %v2039 = vpop.f32.mrb[0].mxu0
      %v2040 = vadd.f32 0.0, %v2039
      %v2041 = vpop.f32.mrb[0].mxu0
      %v2042 = vpop.f32.mrb[0].mxu0
      %v2043 = vadd.f32 0.0, %v2042
      %v2044 = vpop.f32.mrb[0].mxu0
      %2045 = vmatprep.mubr.bf16.mxu0 0
      %2046 = vmatmul.mubr.bf16.gmra.mrb[0].mxu0 %v1976
      %v2047 = vpop.f32.mrb[0].mxu0
      %v2048 = vadd.f32 0.0, %v2047
      %v2049 = vpop.f32.mrb[0].mxu0
      %v2050 = vpop.f32.mrb[0].mxu0
      %v2051 = vpop.f32.mrb[0].mxu0
      %2052 = vdwg.mxu0
      %v2053 = vadd.f32 %v1902, %v2016
      %v2054 = vadd.f32 %v1903, %v2019
      %v2055 = vadd.f32 %v1904, %v2024
      %v2056 = vadd.f32 %v1905, %v2027
      %v2057 = vadd.f32 %v1906, %v2032
      %v2058 = vadd.f32 %v1907, %v2035
      %v2059 = vadd.f32 %v1908, %v2040
      %v2060 = vadd.f32 %v1909, %v2043
      %v2061 = vadd.f32 %v1910, %v2048
      %s2062 = scalar_lea.vmem %s2, 10
      %v2063 = vld [vmem:[%s2062] sm:$0x3]
      %v2064 = vcombine.low %v1062, %v1069
      %v2065 = vcombine.low %v1076, %v1104
      %v2067 = vunpack.c.l.s4 1966171168
      %v2068 = vunpack.c.0.s8 %v2067
      %v2069 = vlaneseq
      %v2070 = vshrl.u32 %v2069, 7
      %v2071 = vsub.s32 %v2068, %v2070
      %v2072 = vrot.slane %v2064, %v2071
      %v2074 = vunpack.c.l.s4 1966171168
      %v2075 = vunpack.c.0.s8 %v2074
      %v2076 = vlaneseq
      %v2077 = vshrl.u32 %v2076, 7
      %v2078 = vsub.s32 %v2075, %v2077
      %v2079 = vrot.slane %v2065, %v2078
      %v2080 = vcombine.low %v2072, %v2079
      %v2081 = vcombine.low %v1111, %v1118
      %v2082 = vcombine.low %v1125, %v1153
      %v2084 = vunpack.c.l.s4 1966171168
      %v2085 = vunpack.c.0.s8 %v2084
      %v2086 = vlaneseq
      %v2087 = vshrl.u32 %v2086, 7
      %v2088 = vsub.s32 %v2085, %v2087
      %v2089 = vrot.slane %v2081, %v2088
      %v2091 = vunpack.c.l.s4 1966171168
      %v2092 = vunpack.c.0.s8 %v2091
      %v2093 = vlaneseq
      %v2094 = vshrl.u32 %v2093, 7
      %v2095 = vsub.s32 %v2092, %v2094
      %v2096 = vrot.slane %v2082, %v2095
      %v2097 = vcombine.low %v2089, %v2096
      %v2098 = vcombine.low %v1160, %v1167
      %v2099 = vcombine.low %v1174, %v1200
      %v2101 = vunpack.c.l.s4 1966171168
      %v2102 = vunpack.c.0.s8 %v2101
      %v2103 = vlaneseq
      %v2104 = vshrl.u32 %v2103, 7
      %v2105 = vsub.s32 %v2102, %v2104
      %v2106 = vrot.slane %v2098, %v2105
      %v2108 = vunpack.c.l.s4 1966171168
      %v2109 = vunpack.c.0.s8 %v2108
      %v2110 = vlaneseq
      %v2111 = vshrl.u32 %v2110, 7
      %v2112 = vsub.s32 %v2109, %v2111
      %v2113 = vrot.slane %v2099, %v2112
      %v2114 = vcombine.low %v2106, %v2113
      %v2115 = vcombine.low %v869, %v876
      %v2116 = vcombine.low %v877, %v878
      %v2117 = vcombine.low %v893, %v900
      %v2119 = vunpack.c.l.s4 1966171168
      %v2120 = vunpack.c.0.s8 %v2119
      %v2121 = vlaneseq
      %v2122 = vshrl.u32 %v2121, 7
      %v2123 = vsub.s32 %v2120, %v2122
      %v2124 = vrot.slane %v2115, %v2123
      %v2126 = vunpack.c.l.s4 1966171168
      %v2127 = vunpack.c.0.s8 %v2126
      %v2128 = vlaneseq
      %v2129 = vshrl.u32 %v2128, 7
      %v2130 = vsub.s32 %v2127, %v2129
      %v2131 = vrot.slane %v2116, %v2130
      %v2133 = vunpack.c.l.s4 1966171168
      %v2134 = vunpack.c.0.s8 %v2133
      %v2135 = vlaneseq
      %v2136 = vshrl.u32 %v2135, 7
      %v2137 = vsub.s32 %v2134, %v2136
      %v2138 = vrot.slane %v2117, %v2137
      %v2139 = vcombine.low %v1207, %v2124
      %v2140 = vcombine.low %v2131, %v2138
      %v2142 = vunpack.c.l.s4 1966171168
      %v2143 = vunpack.c.0.s8 %v2142
      %v2144 = vlaneseq
      %v2145 = vshrl.u32 %v2144, 7
      %v2146 = vsub.s32 %v2143, %v2145
      %v2147 = vrot.slane %v2139, %v2146
      %v2149 = vunpack.c.l.s4 1966171168
      %v2150 = vunpack.c.0.s8 %v2149
      %v2151 = vlaneseq
      %v2152 = vshrl.u32 %v2151, 7
      %v2153 = vsub.s32 %v2150, %v2152
      %v2154 = vrot.slane %v2140, %v2153
      %v2155 = vcombine.low %v2147, %v2154
      %v2156 = vcombine.low %v901, %v902
      %v2157 = vcombine.low %v916, %v931
      %v2159 = vunpack.c.l.s4 1966171168
      %v2160 = vunpack.c.0.s8 %v2159
      %v2161 = vlaneseq
      %v2162 = vshrl.u32 %v2161, 7
      %v2163 = vsub.s32 %v2160, %v2162
      %v2164 = vrot.slane %v2156, %v2163
      %v2166 = vunpack.c.l.s4 1966171168
      %v2167 = vunpack.c.0.s8 %v2166
      %v2168 = vlaneseq
      %v2169 = vshrl.u32 %v2168, 7
      %v2170 = vsub.s32 %v2167, %v2169
      %v2171 = vrot.slane %v2157, %v2170
      %v2172 = vcombine.low %v2164, %v2171
      %v2174 = vunpack.c.l.s4 1966171168
      %v2175 = vunpack.c.0.s8 %v2174
      %v2176 = vlaneseq
      %v2177 = vshrl.u32 %v2176, 7
      %v2178 = vsub.s32 %v2175, %v2177
      %v2179 = vrot.slane %v2172, %v2178
      %v2181 = vsel %vm1271, %v2080, 0
      %v2184 = vsel %vm1271, %v2097, 0
      %v2187 = vsel %vm1271, %v2114, 0
      %v2190 = vsel %vm1271, %v2155, 0
      %v2193 = vsel %vm1271, %v2179, 0
      %v2196 = vsel %vm1287, %v2063, 0
      %2198 = vmatprep.subr.bf16.mxu0 0
      %2199 = vmatpush1.bf16.msra.mxu0 %v2196
      %2200 = vmatprep.subr.bf16.mxu0 0
      %2201 = vmatpush1.bf16.msra.mxu0 0
      %2202 = vmatprep.subr.bf16.mxu0 0
      %2203 = vmatpush1.bf16.msra.mxu0 0
      %2204 = vmatprep.subr.bf16.mxu0 0
      %2205 = vmatpush1.bf16.msra.mxu0 0
      %2206 = vmatprep.subr.bf16.mxu0 0
      %2207 = vmatpush1.bf16.msra.mxu0 0
      %2208 = vmatprep.subr.bf16.mxu0 0
      %2209 = vmatpush1.bf16.msra.mxu0 0
      %2210 = vmatprep.subr.bf16.mxu0 0
      %2211 = vmatpush1.bf16.msra.mxu0 0
      %2212 = vmatprep.subr.bf16.mxu0 0
      %2213 = vmatpush1.bf16.msra.mxu0 0
      %2214 = vmatprep.subr.bf16.mxu0 0
      %2215 = vmatpush1.bf16.msra.mxu0 0
      %2216 = vmatprep.subr.bf16.mxu0 0
      %2217 = vmatpush1.bf16.msra.mxu0 0
      %2218 = vmatprep.subr.bf16.mxu0 0
      %2219 = vmatpush1.bf16.msra.mxu0 0
      %2220 = vmatprep.subr.bf16.mxu0 0
      %2221 = vmatpush1.bf16.msra.mxu0 0
      %2222 = vmatprep.subr.bf16.mxu0 0
      %2223 = vmatpush1.bf16.msra.mxu0 0
      %2224 = vmatprep.subr.bf16.mxu0 0
      %2225 = vmatpush1.bf16.msra.mxu0 0
      %2226 = vmatprep.subr.bf16.mxu0 0
      %2227 = vmatpush1.bf16.msra.mxu0 0
      %2228 = vmatprep.subr.bf16.mxu0 0
      %2229 = vmatpush1.bf16.msra.mxu0 0
      %2230 = vmatprep.mubr.bf16.mxu0 0
      %2231 = vmatmul.mubr.bf16.gmra.mrb[0].mxu0 %v2181
      %v2232 = vpop.f32.mrb[0].mxu0
      %v2233 = vadd.f32 0.0, %v2232
      %v2234 = vpop.f32.mrb[0].mxu0
      %v2235 = vpop.f32.mrb[0].mxu0
      %v2236 = vadd.f32 0.0, %v2235
      %v2237 = vpop.f32.mrb[0].mxu0
      %2238 = vmatprep.mubr.bf16.mxu0 0
      %2239 = vmatmul.mubr.bf16.gmra.mrb[0].mxu0 %v2184
      %v2240 = vpop.f32.mrb[0].mxu0
      %v2241 = vadd.f32 0.0, %v2240
      %v2242 = vpop.f32.mrb[0].mxu0
      %v2243 = vpop.f32.mrb[0].mxu0
      %v2244 = vadd.f32 0.0, %v2243
      %v2245 = vpop.f32.mrb[0].mxu0
      %2246 = vmatprep.mubr.bf16.mxu0 0
      %2247 = vmatmul.mubr.bf16.gmra.mrb[0].mxu0 %v2187
      %v2248 = vpop.f32.mrb[0].mxu0
      %v2249 = vadd.f32 0.0, %v2248
      %v2250 = vpop.f32.mrb[0].mxu0
      %v2251 = vpop.f32.mrb[0].mxu0
      %v2252 = vadd.f32 0.0, %v2251
      %v2253 = vpop.f32.mrb[0].mxu0
      %2254 = vmatprep.mubr.bf16.mxu0 0
      %2255 = vmatmul.mubr.bf16.gmra.mrb[0].mxu0 %v2190
      %v2256 = vpop.f32.mrb[0].mxu0
      %v2257 = vadd.f32 0.0, %v2256
      %v2258 = vpop.f32.mrb[0].mxu0
      %v2259 = vpop.f32.mrb[0].mxu0
      %v2260 = vadd.f32 0.0, %v2259
      %v2261 = vpop.f32.mrb[0].mxu0
      %2262 = vmatprep.mubr.bf16.mxu0 0
      %2263 = vmatmul.mubr.bf16.gmra.mrb[0].mxu0 %v2193
      %v2264 = vpop.f32.mrb[0].mxu0
      %v2265 = vadd.f32 0.0, %v2264
      %v2266 = vpop.f32.mrb[0].mxu0
      %v2267 = vpop.f32.mrb[0].mxu0
      %v2268 = vpop.f32.mrb[0].mxu0
      %2269 = vdwg.mxu0
      %v2270 = vadd.f32 %v2053, %v2233
      %v2271 = vadd.f32 %v2054, %v2236
      %v2272 = vadd.f32 %v2055, %v2241
      %v2273 = vadd.f32 %v2056, %v2244
      %v2274 = vadd.f32 %v2057, %v2249
      %v2275 = vadd.f32 %v2058, %v2252
      %v2276 = vadd.f32 %v2059, %v2257
      %v2277 = vadd.f32 %v2060, %v2260
      %v2278 = vadd.f32 %v2061, %v2265
      %s2279 = scalar_lea.vmem %s2, 12
      %v2280 = vld [vmem:[%s2279] sm:$0x3]
      %v2281 = vcombine.low %v938, %v939
      %v2282 = vcombine.low %v940, %v955
      %v2284 = vunpack.c.l.s4 1966171168
      %v2285 = vunpack.c.0.s8 %v2284
      %v2286 = vlaneseq
      %v2287 = vshrl.u32 %v2286, 7
      %v2288 = vsub.s32 %v2285, %v2287
      %v2289 = vrot.slane %v2281, %v2288
      %v2291 = vunpack.c.l.s4 1966171168
      %v2292 = vunpack.c.0.s8 %v2291
      %v2293 = vlaneseq
      %v2294 = vshrl.u32 %v2293, 7
      %v2295 = vsub.s32 %v2292, %v2294
      %v2296 = vrot.slane %v2282, %v2295
      %v2297 = vcombine.low %v2289, %v2296
      %v2299 = vunpack.c.l.s4 1966171168
      %v2300 = vunpack.c.0.s8 %v2299
      %v2301 = vlaneseq
      %v2302 = vshrl.u32 %v2301, 7
      %v2303 = vsub.s32 %v2300, %v2302
      %v2304 = vrot.slane %v2297, %v2303
      %v2305 = vcombine.low %v2179, %v2304
      %v2306 = vcombine.low %v962, %v963
      %v2307 = vcombine.low %v964, %v978
      %v2309 = vunpack.c.l.s4 1966171168
      %v2310 = vunpack.c.0.s8 %v2309
      %v2311 = vlaneseq
      %v2312 = vshrl.u32 %v2311, 7
      %v2313 = vsub.s32 %v2310, %v2312
      %v2314 = vrot.slane %v2306, %v2313
      %v2316 = vunpack.c.l.s4 1966171168
      %v2317 = vunpack.c.0.s8 %v2316
      %v2318 = vlaneseq
      %v2319 = vshrl.u32 %v2318, 7
      %v2320 = vsub.s32 %v2317, %v2319
      %v2321 = vrot.slane %v2307, %v2320
      %v2322 = vcombine.low %v2314, %v2321
      %v2324 = vunpack.c.l.s4 1966171168
      %v2325 = vunpack.c.0.s8 %v2324
      %v2326 = vlaneseq
      %v2327 = vshrl.u32 %v2326, 7
      %v2328 = vsub.s32 %v2325, %v2327
      %v2329 = vrot.slane %v2322, %v2328
      %v2331 = vsel %vm1271, %v2305, 0
      %v2334 = vsel %vm1271, %v2329, 0
      %v2337 = vsel %vm1287, %v2280, 0
      %2339 = vmatprep.subr.bf16.mxu0 0
      %2340 = vmatpush1.bf16.msra.mxu0 %v2337
      %2341 = vmatprep.subr.bf16.mxu0 0
      %2342 = vmatpush1.bf16.msra.mxu0 0
      %2343 = vmatprep.subr.bf16.mxu0 0
      %2344 = vmatpush1.bf16.msra.mxu0 0
      %2345 = vmatprep.subr.bf16.mxu0 0
      %2346 = vmatpush1.bf16.msra.mxu0 0
      %2347 = vmatprep.subr.bf16.mxu0 0
      %2348 = vmatpush1.bf16.msra.mxu0 0
      %2349 = vmatprep.subr.bf16.mxu0 0
      %2350 = vmatpush1.bf16.msra.mxu0 0
      %2351 = vmatprep.subr.bf16.mxu0 0
      %2352 = vmatpush1.bf16.msra.mxu0 0
      %2353 = vmatprep.subr.bf16.mxu0 0
      %2354 = vmatpush1.bf16.msra.mxu0 0
      %2355 = vmatprep.subr.bf16.mxu0 0
      %2356 = vmatpush1.bf16.msra.mxu0 0
      %2357 = vmatprep.subr.bf16.mxu0 0
      %2358 = vmatpush1.bf16.msra.mxu0 0
      %2359 = vmatprep.subr.bf16.mxu0 0
      %2360 = vmatpush1.bf16.msra.mxu0 0
      %2361 = vmatprep.subr.bf16.mxu0 0
      %2362 = vmatpush1.bf16.msra.mxu0 0
      %2363 = vmatprep.subr.bf16.mxu0 0
      %2364 = vmatpush1.bf16.msra.mxu0 0
      %2365 = vmatprep.subr.bf16.mxu0 0
      %2366 = vmatpush1.bf16.msra.mxu0 0
      %2367 = vmatprep.subr.bf16.mxu0 0
      %2368 = vmatpush1.bf16.msra.mxu0 0
      %2369 = vmatprep.subr.bf16.mxu0 0
      %2370 = vmatpush1.bf16.msra.mxu0 0
      %2371 = vmatprep.mubr.bf16.mxu0 0
      %2372 = vmatmul.mubr.bf16.gmra.mrb[0].mxu0 %v2184
      %v2373 = vpop.f32.mrb[0].mxu0
      %v2374 = vadd.f32 0.0, %v2373
      %v2375 = vpop.f32.mrb[0].mxu0
      %v2376 = vpop.f32.mrb[0].mxu0
      %v2377 = vadd.f32 0.0, %v2376
      %v2378 = vpop.f32.mrb[0].mxu0
      %2379 = vmatprep.mubr.bf16.mxu0 0
      %2380 = vmatmul.mubr.bf16.gmra.mrb[0].mxu0 %v2187
      %v2381 = vpop.f32.mrb[0].mxu0
      %v2382 = vadd.f32 0.0, %v2381
      %v2383 = vpop.f32.mrb[0].mxu0
      %v2384 = vpop.f32.mrb[0].mxu0
      %v2385 = vadd.f32 0.0, %v2384
      %v2386 = vpop.f32.mrb[0].mxu0
      %2387 = vmatprep.mubr.bf16.mxu0 0
      %2388 = vmatmul.mubr.bf16.gmra.mrb[0].mxu0 %v2190
      %v2389 = vpop.f32.mrb[0].mxu0
      %v2390 = vadd.f32 0.0, %v2389
      %v2391 = vpop.f32.mrb[0].mxu0
      %v2392 = vpop.f32.mrb[0].mxu0
      %v2393 = vadd.f32 0.0, %v2392
      %v2394 = vpop.f32.mrb[0].mxu0
      %2395 = vmatprep.mubr.bf16.mxu0 0
      %2396 = vmatmul.mubr.bf16.gmra.mrb[0].mxu0 %v2331
      %v2397 = vpop.f32.mrb[0].mxu0
      %v2398 = vadd.f32 0.0, %v2397
      %v2399 = vpop.f32.mrb[0].mxu0
      %v2400 = vpop.f32.mrb[0].mxu0
      %v2401 = vadd.f32 0.0, %v2400
      %v2402 = vpop.f32.mrb[0].mxu0
      %2403 = vmatprep.mubr.bf16.mxu0 0
      %2404 = vmatmul.mubr.bf16.gmra.mrb[0].mxu0 %v2334
      %v2405 = vpop.f32.mrb[0].mxu0
      %v2406 = vadd.f32 0.0, %v2405
      %v2407 = vpop.f32.mrb[0].mxu0
      %v2408 = vpop.f32.mrb[0].mxu0
      %v2409 = vpop.f32.mrb[0].mxu0
      %2410 = vdwg.mxu0
      %v2411 = vadd.f32 %v2270, %v2374
      %v2412 = vadd.f32 %v2271, %v2377
      %v2413 = vadd.f32 %v2272, %v2382
      %v2414 = vadd.f32 %v2273, %v2385
      %v2415 = vadd.f32 %v2274, %v2390
      %v2416 = vadd.f32 %v2275, %v2393
      %v2417 = vadd.f32 %v2276, %v2398
      %v2418 = vadd.f32 %v2277, %v2401
      %v2419 = vadd.f32 %v2278, %v2406
      %s2420 = scalar_lea.vmem %s2, 14
      %v2421 = vld [vmem:[%s2420] sm:$0x3]
      %v2423 = vunpack.c.l.s4 1966171168
      %v2424 = vunpack.c.0.s8 %v2423
      %v2425 = vlaneseq
      %v2426 = vshrl.u32 %v2425, 7
      %v2427 = vsub.s32 %v2424, %v2426
      %v2428 = vrot.slane %v992, %v2427
      %v2430 = vunpack.c.l.s4 1966171168
      %v2431 = vunpack.c.0.s8 %v2430
      %v2432 = vlaneseq
      %v2433 = vshrl.u32 %v2432, 7
      %v2434 = vsub.s32 %v2431, %v2433
      %v2435 = vrot.slane %v2428, %v2434
      %v2436 = vcombine.low %v2329, %v2435
      %v2437 = vshrl.u32 %v2097, 16
      %v2439 = vshll.u32 %v2097, 16
      %v2441 = vrot.slane %v2439, 1
      %v2442 = vor.u32 %v2437, %v2441
      %v2443 = vshll.u32 %v2114, 16
      %v2445 = vrot.slane %v2443, 1
      %v2446 = vsel %vm1231, %v2442, %v2445
      %v2447 = vshrl.u32 %v2114, 16
      %v2449 = vor.u32 %v2447, %v2445
      %v2450 = vshll.u32 %v2155, 16
      %v2452 = vrot.slane %v2450, 1
      %v2453 = vsel %vm1231, %v2449, %v2452
      %v2454 = vshrl.u32 %v2155, 16
      %v2456 = vor.u32 %v2454, %v2452
      %v2457 = vshll.u32 %v2305, 16
      %v2459 = vrot.slane %v2457, 1
      %v2460 = vsel %vm1231, %v2456, %v2459
      %v2461 = vshrl.u32 %v2305, 16
      %v2463 = vor.u32 %v2461, %v2459
      %v2465 = vshll.u32 %v2436, 16
      %v2467 = vrot.slane %v2465, 1
      %v2468 = vsel %vm1231, %v2463, %v2467
      %v2469 = vshrl.u32 %v2436, 16
      %v2471 = vor.u32 %v2469, %v2467
      %v2473 = vsel %vm1271, %v2446, 0
      %v2476 = vsel %vm1271, %v2453, 0
      %v2479 = vsel %vm1271, %v2460, 0
      %v2482 = vsel %vm1271, %v2468, 0
      %v2485 = vsel %vm1271, %v2471, 0
      %v2488 = vsel %vm1287, %v2421, 0
      %2490 = vmatprep.subr.bf16.mxu0 0
      %2491 = vmatpush1.bf16.msra.mxu0 %v2488
      %2492 = vmatprep.subr.bf16.mxu0 0
      %2493 = vmatpush1.bf16.msra.mxu0 0
      %2494 = vmatprep.subr.bf16.mxu0 0
      %2495 = vmatpush1.bf16.msra.mxu0 0
      %2496 = vmatprep.subr.bf16.mxu0 0
      %2497 = vmatpush1.bf16.msra.mxu0 0
      %2498 = vmatprep.subr.bf16.mxu0 0
      %2499 = vmatpush1.bf16.msra.mxu0 0
      %2500 = vmatprep.subr.bf16.mxu0 0
      %2501 = vmatpush1.bf16.msra.mxu0 0
      %2502 = vmatprep.subr.bf16.mxu0 0
      %2503 = vmatpush1.bf16.msra.mxu0 0
      %2504 = vmatprep.subr.bf16.mxu0 0
      %2505 = vmatpush1.bf16.msra.mxu0 0
      %2506 = vmatprep.subr.bf16.mxu0 0
      %2507 = vmatpush1.bf16.msra.mxu0 0
      %2508 = vmatprep.subr.bf16.mxu0 0
      %2509 = vmatpush1.bf16.msra.mxu0 0
      %2510 = vmatprep.subr.bf16.mxu0 0
      %2511 = vmatpush1.bf16.msra.mxu0 0
      %2512 = vmatprep.subr.bf16.mxu0 0
      %2513 = vmatpush1.bf16.msra.mxu0 0
      %2514 = vmatprep.subr.bf16.mxu0 0
      %2515 = vmatpush1.bf16.msra.mxu0 0
      %2516 = vmatprep.subr.bf16.mxu0 0
      %2517 = vmatpush1.bf16.msra.mxu0 0
      %2518 = vmatprep.subr.bf16.mxu0 0
      %2519 = vmatpush1.bf16.msra.mxu0 0
      %2520 = vmatprep.subr.bf16.mxu0 0
      %2521 = vmatpush1.bf16.msra.mxu0 0
      %2522 = vmatprep.mubr.bf16.mxu0 0
      %2523 = vmatmul.mubr.bf16.gmra.mrb[0].mxu0 %v2473
      %v2524 = vpop.f32.mrb[0].mxu0
      %v2525 = vadd.f32 0.0, %v2524
      %v2526 = vpop.f32.mrb[0].mxu0
      %v2527 = vpop.f32.mrb[0].mxu0
      %v2528 = vadd.f32 0.0, %v2527
      %v2529 = vpop.f32.mrb[0].mxu0
      %2530 = vmatprep.mubr.bf16.mxu0 0
      %2531 = vmatmul.mubr.bf16.gmra.mrb[0].mxu0 %v2476
      %v2532 = vpop.f32.mrb[0].mxu0
      %v2533 = vadd.f32 0.0, %v2532
      %v2534 = vpop.f32.mrb[0].mxu0
      %v2535 = vpop.f32.mrb[0].mxu0
      %v2536 = vadd.f32 0.0, %v2535
      %v2537 = vpop.f32.mrb[0].mxu0
      %2538 = vmatprep.mubr.bf16.mxu0 0
      %2539 = vmatmul.mubr.bf16.gmra.mrb[0].mxu0 %v2479
      %v2540 = vpop.f32.mrb[0].mxu0
      %v2541 = vadd.f32 0.0, %v2540
      %v2542 = vpop.f32.mrb[0].mxu0
      %v2543 = vpop.f32.mrb[0].mxu0
      %v2544 = vadd.f32 0.0, %v2543
      %v2545 = vpop.f32.mrb[0].mxu0
      %2546 = vmatprep.mubr.bf16.mxu0 0
      %2547 = vmatmul.mubr.bf16.gmra.mrb[0].mxu0 %v2482
      %v2548 = vpop.f32.mrb[0].mxu0
      %v2549 = vadd.f32 0.0, %v2548
      %v2550 = vpop.f32.mrb[0].mxu0
      %v2551 = vpop.f32.mrb[0].mxu0
      %v2552 = vadd.f32 0.0, %v2551
      %v2553 = vpop.f32.mrb[0].mxu0
      %2554 = vmatprep.mubr.bf16.mxu0 0
      %2555 = vmatmul.mubr.bf16.gmra.mrb[0].mxu0 %v2485
      %v2556 = vpop.f32.mrb[0].mxu0
      %v2557 = vadd.f32 0.0, %v2556
      %v2558 = vpop.f32.mrb[0].mxu0
      %v2559 = vpop.f32.mrb[0].mxu0
      %v2560 = vpop.f32.mrb[0].mxu0
      %2561 = vdwg.mxu0
      %v2562 = vadd.f32 %v2411, %v2525
      %v2563 = vadd.f32 %v2412, %v2528
      %v2564 = vadd.f32 %v2413, %v2533
      %v2565 = vadd.f32 %v2414, %v2536
      %v2566 = vadd.f32 %v2415, %v2541
      %v2567 = vadd.f32 %v2416, %v2544
      %v2568 = vadd.f32 %v2417, %v2549
      %v2569 = vadd.f32 %v2418, %v2552
      %v2570 = vadd.f32 %v2419, %v2557
      %s2571 = scalar_lea.vmem %s2, 16
      %v2572 = vld [vmem:[%s2571] sm:$0x3]
      %v2573 = vcombine.low %v1566, %v1573
      %v2574 = vcombine.low %v1580, %v1608
      %v2576 = vunpack.c.l.s4 1966171168
      %v2577 = vunpack.c.0.s8 %v2576
      %v2578 = vlaneseq
      %v2579 = vshrl.u32 %v2578, 7
      %v2580 = vsub.s32 %v2577, %v2579
      %v2581 = vrot.slane %v2573, %v2580
      %v2583 = vunpack.c.l.s4 1966171168
      %v2584 = vunpack.c.0.s8 %v2583
      %v2585 = vlaneseq
      %v2586 = vshrl.u32 %v2585, 7
      %v2587 = vsub.s32 %v2584, %v2586
      %v2588 = vrot.slane %v2574, %v2587
      %v2589 = vcombine.low %v2581, %v2588
      %v2590 = vcombine.low %v1615, %v1622
      %v2591 = vcombine.low %v1629, %v1655
      %v2593 = vunpack.c.l.s4 1966171168
      %v2594 = vunpack.c.0.s8 %v2593
      %v2595 = vlaneseq
      %v2596 = vshrl.u32 %v2595, 7
      %v2597 = vsub.s32 %v2594, %v2596
      %v2598 = vrot.slane %v2590, %v2597
      %v2600 = vunpack.c.l.s4 1966171168
      %v2601 = vunpack.c.0.s8 %v2600
      %v2602 = vlaneseq
      %v2603 = vshrl.u32 %v2602, 7
      %v2604 = vsub.s32 %v2601, %v2603
      %v2605 = vrot.slane %v2591, %v2604
      %v2606 = vcombine.low %v2598, %v2605
      %v2607 = vcombine.low %v1662, %v1780
      %v2608 = vcombine.low %v1787, %v1805
      %v2610 = vunpack.c.l.s4 1966171168
      %v2611 = vunpack.c.0.s8 %v2610
      %v2612 = vlaneseq
      %v2613 = vshrl.u32 %v2612, 7
      %v2614 = vsub.s32 %v2611, %v2613
      %v2615 = vrot.slane %v2607, %v2614
      %v2617 = vunpack.c.l.s4 1966171168
      %v2618 = vunpack.c.0.s8 %v2617
      %v2619 = vlaneseq
      %v2620 = vshrl.u32 %v2619, 7
      %v2621 = vsub.s32 %v2618, %v2620
      %v2622 = vrot.slane %v2608, %v2621
      %v2623 = vcombine.low %v2615, %v2622
      %v2624 = vcombine.low %v931, %v938
      %v2625 = vcombine.low %v939, %v940
      %v2626 = vcombine.low %v955, %v962
      %v2628 = vunpack.c.l.s4 1966171168
      %v2629 = vunpack.c.0.s8 %v2628
      %v2630 = vlaneseq
      %v2631 = vshrl.u32 %v2630, 7
      %v2632 = vsub.s32 %v2629, %v2631
      %v2633 = vrot.slane %v2624, %v2632
      %v2635 = vunpack.c.l.s4 1966171168
      %v2636 = vunpack.c.0.s8 %v2635
      %v2637 = vlaneseq
      %v2638 = vshrl.u32 %v2637, 7
      %v2639 = vsub.s32 %v2636, %v2638
      %v2640 = vrot.slane %v2625, %v2639
      %v2642 = vunpack.c.l.s4 1966171168
      %v2643 = vunpack.c.0.s8 %v2642
      %v2644 = vlaneseq
      %v2645 = vshrl.u32 %v2644, 7
      %v2646 = vsub.s32 %v2643, %v2645
      %v2647 = vrot.slane %v2626, %v2646
      %v2648 = vcombine.low %v1812, %v2633
      %v2649 = vcombine.low %v2640, %v2647
      %v2651 = vunpack.c.l.s4 1966171168
      %v2652 = vunpack.c.0.s8 %v2651
      %v2653 = vlaneseq
      %v2654 = vshrl.u32 %v2653, 7
      %v2655 = vsub.s32 %v2652, %v2654
      %v2656 = vrot.slane %v2648, %v2655
      %v2658 = vunpack.c.l.s4 1966171168
      %v2659 = vunpack.c.0.s8 %v2658
      %v2660 = vlaneseq
      %v2661 = vshrl.u32 %v2660, 7
      %v2662 = vsub.s32 %v2659, %v2661
      %v2663 = vrot.slane %v2649, %v2662
      %v2664 = vcombine.low %v2656, %v2663
      %v2665 = vcombine.low %v963, %v964
      %v2666 = vcombine.low %v978, %v992
      %v2668 = vunpack.c.l.s4 1966171168
      %v2669 = vunpack.c.0.s8 %v2668
      %v2670 = vlaneseq
      %v2671 = vshrl.u32 %v2670, 7
      %v2672 = vsub.s32 %v2669, %v2671
      %v2673 = vrot.slane %v2665, %v2672
      %v2675 = vunpack.c.l.s4 1966171168
      %v2676 = vunpack.c.0.s8 %v2675
      %v2677 = vlaneseq
      %v2678 = vshrl.u32 %v2677, 7
      %v2679 = vsub.s32 %v2676, %v2678
      %v2680 = vrot.slane %v2666, %v2679
      %v2681 = vcombine.low %v2673, %v2680
      %v2683 = vunpack.c.l.s4 1966171168
      %v2684 = vunpack.c.0.s8 %v2683
      %v2685 = vlaneseq
      %v2686 = vshrl.u32 %v2685, 7
      %v2687 = vsub.s32 %v2684, %v2686
      %v2688 = vrot.slane %v2681, %v2687
      %v2690 = vsel %vm1271, %v2589, 0
      %v2693 = vsel %vm1271, %v2606, 0
      %v2696 = vsel %vm1271, %v2623, 0
      %v2699 = vsel %vm1271, %v2664, 0
      %v2702 = vsel %vm1271, %v2688, 0
      %v2705 = vsel %vm1287, %v2572, 0
      %2707 = vmatprep.subr.bf16.mxu0 0
      %2708 = vmatpush1.bf16.msra.mxu0 %v2705
      %2709 = vmatprep.subr.bf16.mxu0 0
      %2710 = vmatpush1.bf16.msra.mxu0 0
      %2711 = vmatprep.subr.bf16.mxu0 0
      %2712 = vmatpush1.bf16.msra.mxu0 0
      %2713 = vmatprep.subr.bf16.mxu0 0
      %2714 = vmatpush1.bf16.msra.mxu0 0
      %2715 = vmatprep.subr.bf16.mxu0 0
      %2716 = vmatpush1.bf16.msra.mxu0 0
      %2717 = vmatprep.subr.bf16.mxu0 0
      %2718 = vmatpush1.bf16.msra.mxu0 0
      %2719 = vmatprep.subr.bf16.mxu0 0
      %2720 = vmatpush1.bf16.msra.mxu0 0
      %2721 = vmatprep.subr.bf16.mxu0 0
      %2722 = vmatpush1.bf16.msra.mxu0 0
      %2723 = vmatprep.subr.bf16.mxu0 0
      %2724 = vmatpush1.bf16.msra.mxu0 0
      %2725 = vmatprep.subr.bf16.mxu0 0
      %2726 = vmatpush1.bf16.msra.mxu0 0
      %2727 = vmatprep.subr.bf16.mxu0 0
      %2728 = vmatpush1.bf16.msra.mxu0 0
      %2729 = vmatprep.subr.bf16.mxu0 0
      %2730 = vmatpush1.bf16.msra.mxu0 0
      %2731 = vmatprep.subr.bf16.mxu0 0
      %2732 = vmatpush1.bf16.msra.mxu0 0
      %2733 = vmatprep.subr.bf16.mxu0 0
      %2734 = vmatpush1.bf16.msra.mxu0 0
      %2735 = vmatprep.subr.bf16.mxu0 0
      %2736 = vmatpush1.bf16.msra.mxu0 0
      %2737 = vmatprep.subr.bf16.mxu0 0
      %2738 = vmatpush1.bf16.msra.mxu0 0
      %2739 = vmatprep.mubr.bf16.mxu0 0
      %2740 = vmatmul.mubr.bf16.gmra.mrb[0].mxu0 %v2690
      %v2741 = vpop.f32.mrb[0].mxu0
      %v2742 = vadd.f32 0.0, %v2741
      %v2743 = vpop.f32.mrb[0].mxu0
      %v2744 = vpop.f32.mrb[0].mxu0
      %v2745 = vadd.f32 0.0, %v2744
      %v2746 = vpop.f32.mrb[0].mxu0
      %2747 = vmatprep.mubr.bf16.mxu0 0
      %2748 = vmatmul.mubr.bf16.gmra.mrb[0].mxu0 %v2693
      %v2749 = vpop.f32.mrb[0].mxu0
      %v2750 = vadd.f32 0.0, %v2749
      %v2751 = vpop.f32.mrb[0].mxu0
      %v2752 = vpop.f32.mrb[0].mxu0
      %v2753 = vadd.f32 0.0, %v2752
      %v2754 = vpop.f32.mrb[0].mxu0
      %2755 = vmatprep.mubr.bf16.mxu0 0
      %2756 = vmatmul.mubr.bf16.gmra.mrb[0].mxu0 %v2696
      %v2757 = vpop.f32.mrb[0].mxu0
      %v2758 = vadd.f32 0.0, %v2757
      %v2759 = vpop.f32.mrb[0].mxu0
      %v2760 = vpop.f32.mrb[0].mxu0
      %v2761 = vadd.f32 0.0, %v2760
      %v2762 = vpop.f32.mrb[0].mxu0
      %2763 = vmatprep.mubr.bf16.mxu0 0
      %2764 = vmatmul.mubr.bf16.gmra.mrb[0].mxu0 %v2699
      %v2765 = vpop.f32.mrb[0].mxu0
      %v2766 = vadd.f32 0.0, %v2765
      %v2767 = vpop.f32.mrb[0].mxu0
      %v2768 = vpop.f32.mrb[0].mxu0
      %v2769 = vadd.f32 0.0, %v2768
      %v2770 = vpop.f32.mrb[0].mxu0
      %2771 = vmatprep.mubr.bf16.mxu0 0
      %2772 = vmatmul.mubr.bf16.gmra.mrb[0].mxu0 %v2702
      %v2773 = vpop.f32.mrb[0].mxu0
      %v2774 = vadd.f32 0.0, %v2773
      %v2775 = vpop.f32.mrb[0].mxu0
      %v2776 = vpop.f32.mrb[0].mxu0
      %v2777 = vpop.f32.mrb[0].mxu0
      %2778 = vdwg.mxu0
      %v2779 = vadd.f32 %v2562, %v2742
      %v2780 = vadd.f32 %v2563, %v2745
      %v2781 = vadd.f32 %v2564, %v2750
      %v2782 = vadd.f32 %v2565, %v2753
      %v2783 = vadd.f32 %v2566, %v2758
      %v2784 = vadd.f32 %v2567, %v2761
      %v2785 = vadd.f32 %v2568, %v2766
      %v2786 = vadd.f32 %v2569, %v2769
      %v2787 = vadd.f32 %v2570, %v2774
      %v2788 = vld [vmem:[%s3] sm:$0x1]
      %v2790 = vlaneseq
      %v2791 = vshrl.u32 %v2790, 7
      %v2792 = vsub.s32 0, %v2791
      %v2793 = vrot.slane %v2788, %v2792
      %v2795 = vadd.f32 %v2779, %v2793
      %v2796 = vadd.f32 %v2780, %v2793
      %v2797 = vadd.f32 %v2781, %v2793
      %v2798 = vadd.f32 %v2782, %v2793
      %v2799 = vadd.f32 %v2783, %v2793
      %v2800 = vadd.f32 %v2784, %v2793
      %v2801 = vadd.f32 %v2785, %v2793
      %v2802 = vadd.f32 %v2786, %v2793
      %v2803 = vadd.f32 %v2787, %v2793
      %v2804 = vmax.f32 %v2795, 0.0
      %v2805 = vmax.f32 %v2796, 0.0
      %v2806 = vmax.f32 %v2797, 0.0
      %v2807 = vmax.f32 %v2798, 0.0
      %v2808 = vmax.f32 %v2799, 0.0
      %v2809 = vmax.f32 %v2800, 0.0
      %v2810 = vmax.f32 %v2801, 0.0
      %v2811 = vmax.f32 %v2802, 0.0
      %v2812 = vmax.f32 %v2803, 0.0
      %v2813 = vpack.c.bf16 %v2805, %v2804
      %v2814 = vpack.c.bf16 %v2807, %v2806
      %v2815 = vpack.c.bf16 %v2809, %v2808
      %v2816 = vpack.c.bf16 %v2811, %v2810
      %v2817 = vpack.c.bf16 %v2812, %v2812
      %v2818 = vld [vmem:[%s4] sm:$0x3]
      %v2819 = vld [vmem:[%s5] sm:$0x1]
      %v2821 = vlaneseq
      %v2822 = vshrl.u32 %v2821, 7
      %v2823 = vsub.s32 0, %v2822
      %v2824 = vrot.slane %v2819, %v2823
      %v2827 = vsel %vm1271, %v2813, 0
      %v2830 = vsel %vm1271, %v2814, 0
      %v2833 = vsel %vm1271, %v2815, 0
      %v2836 = vsel %vm1271, %v2816, 0
      %v2839 = vsel %vm1271, %v2817, 0
      %v2842 = vsel %vm1287, %v2818, 0
      %2844 = vmatprep.subr.bf16.mxu0 0
      %2845 = vmatpush1.bf16.msra.mxu0 %v2842
      %2846 = vmatprep.subr.bf16.mxu0 0
      %2847 = vmatpush1.bf16.msra.mxu0 0
      %2848 = vmatprep.subr.bf16.mxu0 0
      %2849 = vmatpush1.bf16.msra.mxu0 0
      %2850 = vmatprep.subr.bf16.mxu0 0
      %2851 = vmatpush1.bf16.msra.mxu0 0
      %2852 = vmatprep.subr.bf16.mxu0 0
      %2853 = vmatpush1.bf16.msra.mxu0 0
      %2854 = vmatprep.subr.bf16.mxu0 0
      %2855 = vmatpush1.bf16.msra.mxu0 0
      %2856 = vmatprep.subr.bf16.mxu0 0
      %2857 = vmatpush1.bf16.msra.mxu0 0
      %2858 = vmatprep.subr.bf16.mxu0 0
      %2859 = vmatpush1.bf16.msra.mxu0 0
      %2860 = vmatprep.subr.bf16.mxu0 0
      %2861 = vmatpush1.bf16.msra.mxu0 0
      %2862 = vmatprep.subr.bf16.mxu0 0
      %2863 = vmatpush1.bf16.msra.mxu0 0
      %2864 = vmatprep.subr.bf16.mxu0 0
      %2865 = vmatpush1.bf16.msra.mxu0 0
      %2866 = vmatprep.subr.bf16.mxu0 0
      %2867 = vmatpush1.bf16.msra.mxu0 0
      %2868 = vmatprep.subr.bf16.mxu0 0
      %2869 = vmatpush1.bf16.msra.mxu0 0
      %2870 = vmatprep.subr.bf16.mxu0 0
      %2871 = vmatpush1.bf16.msra.mxu0 0
      %2872 = vmatprep.subr.bf16.mxu0 0
      %2873 = vmatpush1.bf16.msra.mxu0 0
      %2874 = vmatprep.subr.bf16.mxu0 0
      %2875 = vmatpush1.bf16.msra.mxu0 0
      %2876 = vmatprep.mubr.bf16.mxu0 0
      %2877 = vmatmul.mubr.bf16.gmra.mrb[0].mxu0 %v2827
      %v2878 = vpop.f32.mrb[0].mxu0
      %v2879 = vadd.f32 %v2824, %v2878
      %v2880 = vpop.f32.mrb[0].mxu0
      %v2881 = vpop.f32.mrb[0].mxu0
      %v2882 = vadd.f32 %v2824, %v2881
      %v2883 = vpop.f32.mrb[0].mxu0
      %2884 = vmatprep.mubr.bf16.mxu0 0
      %2885 = vmatmul.mubr.bf16.gmra.mrb[0].mxu0 %v2830
      %v2886 = vpop.f32.mrb[0].mxu0
      %v2887 = vadd.f32 %v2824, %v2886
      %v2888 = vpop.f32.mrb[0].mxu0
      %v2889 = vpop.f32.mrb[0].mxu0
      %v2890 = vadd.f32 %v2824, %v2889
      %v2891 = vpop.f32.mrb[0].mxu0
      %2892 = vmatprep.mubr.bf16.mxu0 0
      %2893 = vmatmul.mubr.bf16.gmra.mrb[0].mxu0 %v2833
      %v2894 = vpop.f32.mrb[0].mxu0
      %v2895 = vadd.f32 %v2824, %v2894
      %v2896 = vpop.f32.mrb[0].mxu0
      %v2897 = vpop.f32.mrb[0].mxu0
      %v2898 = vadd.f32 %v2824, %v2897
      %v2899 = vpop.f32.mrb[0].mxu0
      %2900 = vmatprep.mubr.bf16.mxu0 0
      %2901 = vmatmul.mubr.bf16.gmra.mrb[0].mxu0 %v2836
      %v2902 = vpop.f32.mrb[0].mxu0
      %v2903 = vadd.f32 %v2824, %v2902
      %v2904 = vpop.f32.mrb[0].mxu0
      %v2905 = vpop.f32.mrb[0].mxu0
      %v2906 = vadd.f32 %v2824, %v2905
      %v2907 = vpop.f32.mrb[0].mxu0
      %2908 = vmatprep.mubr.bf16.mxu0 0
      %2909 = vmatmul.mubr.bf16.gmra.mrb[0].mxu0 %v2839
      %v2910 = vpop.f32.mrb[0].mxu0
      %v2911 = vadd.f32 %v2824, %v2910
      %v2912 = vpop.f32.mrb[0].mxu0
      %v2913 = vpop.f32.mrb[0].mxu0
      %v2914 = vpop.f32.mrb[0].mxu0
      %2915 = vdwg.mxu0
      %v2925 = vcombine.high %v2879, %v2879
      %v2927 = vunpack.c.l.s4 1983009808
      %v2928 = vunpack.c.0.s8 %v2927
      %v2929 = vlaneseq
      %v2930 = vshrl.u32 %v2929, 7
      %v2931 = vsub.s32 %v2928, %v2930
      %v2932 = vrot.slane %v2879, %v2931
      %v2934 = vunpack.c.l.s4 1983009808
      %v2935 = vunpack.c.0.s8 %v2934
      %v2936 = vlaneseq
      %v2937 = vshrl.u32 %v2936, 7
      %v2938 = vsub.s32 %v2935, %v2937
      %v2939 = vrot.slane %v2925, %v2938
      %v2940 = vcombine.high %v2932, %v2932
      %v2941 = vcombine.high %v2939, %v2939
      %v2942 = vcombine.high %v2882, %v2882
      %v2944 = vunpack.c.l.s4 1983009808
      %v2945 = vunpack.c.0.s8 %v2944
      %v2946 = vlaneseq
      %v2947 = vshrl.u32 %v2946, 7
      %v2948 = vsub.s32 %v2945, %v2947
      %v2949 = vrot.slane %v2882, %v2948
      %v2951 = vunpack.c.l.s4 1983009808
      %v2952 = vunpack.c.0.s8 %v2951
      %v2953 = vlaneseq
      %v2954 = vshrl.u32 %v2953, 7
      %v2955 = vsub.s32 %v2952, %v2954
      %v2956 = vrot.slane %v2942, %v2955
      %v2957 = vcombine.high %v2949, %v2949
      %v2958 = vcombine.high %v2956, %v2956
      %v2959 = vcombine.high %v2887, %v2887
      %v2961 = vunpack.c.l.s4 1983009808
      %v2962 = vunpack.c.0.s8 %v2961
      %v2963 = vlaneseq
      %v2964 = vshrl.u32 %v2963, 7
      %v2965 = vsub.s32 %v2962, %v2964
      %v2966 = vrot.slane %v2887, %v2965
      %v2968 = vunpack.c.l.s4 1983009808
      %v2969 = vunpack.c.0.s8 %v2968
      %v2970 = vlaneseq
      %v2971 = vshrl.u32 %v2970, 7
      %v2972 = vsub.s32 %v2969, %v2971
      %v2973 = vrot.slane %v2959, %v2972
      %v2974 = vcombine.high %v2966, %v2966
      %v2975 = vcombine.high %v2973, %v2973
      %v2976 = vcombine.high %v2890, %v2890
      %v2978 = vunpack.c.l.s4 1983009808
      %v2979 = vunpack.c.0.s8 %v2978
      %v2980 = vlaneseq
      %v2981 = vshrl.u32 %v2980, 7
      %v2982 = vsub.s32 %v2979, %v2981
      %v2983 = vrot.slane %v2890, %v2982
      %v2985 = vunpack.c.l.s4 1983009808
      %v2986 = vunpack.c.0.s8 %v2985
      %v2987 = vlaneseq
      %v2988 = vshrl.u32 %v2987, 7
      %v2989 = vsub.s32 %v2986, %v2988
      %v2990 = vrot.slane %v2976, %v2989
      %v2991 = vcombine.high %v2983, %v2983
      %v2992 = vcombine.high %v2990, %v2990
      %v2993 = vcombine.high %v2895, %v2895
      %v2995 = vunpack.c.l.s4 1983009808
      %v2996 = vunpack.c.0.s8 %v2995
      %v2997 = vlaneseq
      %v2998 = vshrl.u32 %v2997, 7
      %v2999 = vsub.s32 %v2996, %v2998
      %v3000 = vrot.slane %v2895, %v2999
      %v3002 = vunpack.c.l.s4 1983009808
      %v3003 = vunpack.c.0.s8 %v3002
      %v3004 = vlaneseq
      %v3005 = vshrl.u32 %v3004, 7
      %v3006 = vsub.s32 %v3003, %v3005
      %v3007 = vrot.slane %v2993, %v3006
      %v3008 = vcombine.high %v3007, %v3007
      %v3009 = vcombine.high %v2898, %v2898
      %v3011 = vunpack.c.l.s4 1983009808
      %v3012 = vunpack.c.0.s8 %v3011
      %v3013 = vlaneseq
      %v3014 = vshrl.u32 %v3013, 7
      %v3015 = vsub.s32 %v3012, %v3014
      %v3016 = vrot.slane %v2898, %v3015
      %v3018 = vunpack.c.l.s4 1983009808
      %v3019 = vunpack.c.0.s8 %v3018
      %v3020 = vlaneseq
      %v3021 = vshrl.u32 %v3020, 7
      %v3022 = vsub.s32 %v3019, %v3021
      %v3023 = vrot.slane %v3009, %v3022
      %v3024 = vcombine.high %v3016, %v3016
      %v3025 = vcombine.high %v3023, %v3023
      %v3026 = vcombine.high %v2903, %v2903
      %v3028 = vunpack.c.l.s4 1983009808
      %v3029 = vunpack.c.0.s8 %v3028
      %v3030 = vlaneseq
      %v3031 = vshrl.u32 %v3030, 7
      %v3032 = vsub.s32 %v3029, %v3031
      %v3033 = vrot.slane %v2903, %v3032
      %v3035 = vunpack.c.l.s4 1983009808
      %v3036 = vunpack.c.0.s8 %v3035
      %v3037 = vlaneseq
      %v3038 = vshrl.u32 %v3037, 7
      %v3039 = vsub.s32 %v3036, %v3038
      %v3040 = vrot.slane %v3026, %v3039
      %v3041 = vcombine.high %v3033, %v3033
      %v3042 = vcombine.high %v3040, %v3040
      %v3043 = vcombine.high %v2906, %v2906
      %v3045 = vunpack.c.l.s4 1983009808
      %v3046 = vunpack.c.0.s8 %v3045
      %v3047 = vlaneseq
      %v3048 = vshrl.u32 %v3047, 7
      %v3049 = vsub.s32 %v3046, %v3048
      %v3050 = vrot.slane %v2906, %v3049
      %v3052 = vunpack.c.l.s4 1983009808
      %v3053 = vunpack.c.0.s8 %v3052
      %v3054 = vlaneseq
      %v3055 = vshrl.u32 %v3054, 7
      %v3056 = vsub.s32 %v3053, %v3055
      %v3057 = vrot.slane %v3043, %v3056
      %v3058 = vcombine.high %v3050, %v3050
      %v3059 = vcombine.high %v3057, %v3057
      %v3060 = vcombine.high %v2911, %v2911
      %v3062 = vunpack.c.l.s4 1983009808
      %v3063 = vunpack.c.0.s8 %v3062
      %v3064 = vlaneseq
      %v3065 = vshrl.u32 %v3064, 7
      %v3066 = vsub.s32 %v3063, %v3065
      %v3067 = vrot.slane %v2911, %v3066
      %v3069 = vunpack.c.l.s4 1983009808
      %v3070 = vunpack.c.0.s8 %v3069
      %v3071 = vlaneseq
      %v3072 = vshrl.u32 %v3071, 7
      %v3073 = vsub.s32 %v3070, %v3072
      %v3074 = vrot.slane %v3060, %v3073
      %v3075 = vcombine.high %v3067, %v3067
      %v3076 = vcombine.low %v2932, %v2940
      %v3077 = vcombine.low %v2939, %v2941
      %v3079 = vunpack.c.l.s4 1983009808
      %v3080 = vunpack.c.0.s8 %v3079
      %v3081 = vlaneseq
      %v3082 = vshrl.u32 %v3081, 7
      %v3083 = vsub.s32 %v3080, %v3082
      %v3084 = vrot.slane %v3076, %v3083
      %v3086 = vunpack.c.l.s4 1983009808
      %v3087 = vunpack.c.0.s8 %v3086
      %v3088 = vlaneseq
      %v3089 = vshrl.u32 %v3088, 7
      %v3090 = vsub.s32 %v3087, %v3089
      %v3091 = vrot.slane %v3077, %v3090
      %v3092 = vcombine.low %v3084, %v3091
      %v3093 = vcombine.low %v2949, %v2957
      %v3094 = vcombine.low %v2956, %v2958
      %v3096 = vunpack.c.l.s4 1983009808
      %v3097 = vunpack.c.0.s8 %v3096
      %v3098 = vlaneseq
      %v3099 = vshrl.u32 %v3098, 7
      %v3100 = vsub.s32 %v3097, %v3099
      %v3101 = vrot.slane %v3093, %v3100
      %v3103 = vunpack.c.l.s4 1983009808
      %v3104 = vunpack.c.0.s8 %v3103
      %v3105 = vlaneseq
      %v3106 = vshrl.u32 %v3105, 7
      %v3107 = vsub.s32 %v3104, %v3106
      %v3108 = vrot.slane %v3094, %v3107
      %v3109 = vcombine.low %v3101, %v3108
      %v3110 = vcombine.low %v2974, %v2973
      %v3111 = vcombine.low %v2975, %v2983
      %v3113 = vunpack.c.l.s4 1983009808
      %v3114 = vunpack.c.0.s8 %v3113
      %v3115 = vlaneseq
      %v3116 = vshrl.u32 %v3115, 7
      %v3117 = vsub.s32 %v3114, %v3116
      %v3118 = vrot.slane %v3110, %v3117
      %v3120 = vunpack.c.l.s4 1983009808
      %v3121 = vunpack.c.0.s8 %v3120
      %v3122 = vlaneseq
      %v3123 = vshrl.u32 %v3122, 7
      %v3124 = vsub.s32 %v3121, %v3123
      %v3125 = vrot.slane %v3111, %v3124
      %v3126 = vcombine.low %v3118, %v3125
      %v3127 = vcombine.low %v2991, %v2990
      %v3128 = vcombine.low %v2992, %v3000
      %v3130 = vunpack.c.l.s4 1983009808
      %v3131 = vunpack.c.0.s8 %v3130
      %v3132 = vlaneseq
      %v3133 = vshrl.u32 %v3132, 7
      %v3134 = vsub.s32 %v3131, %v3133
      %v3135 = vrot.slane %v3127, %v3134
      %v3137 = vunpack.c.l.s4 1983009808
      %v3138 = vunpack.c.0.s8 %v3137
      %v3139 = vlaneseq
      %v3140 = vshrl.u32 %v3139, 7
      %v3141 = vsub.s32 %v3138, %v3140
      %v3142 = vrot.slane %v3128, %v3141
      %v3143 = vcombine.low %v3135, %v3142
      %v3144 = vcombine.low %v3007, %v3008
      %v3145 = vcombine.low %v3016, %v3024
      %v3147 = vunpack.c.l.s4 1983009808
      %v3148 = vunpack.c.0.s8 %v3147
      %v3149 = vlaneseq
      %v3150 = vshrl.u32 %v3149, 7
      %v3151 = vsub.s32 %v3148, %v3150
      %v3152 = vrot.slane %v3144, %v3151
      %v3154 = vunpack.c.l.s4 1983009808
      %v3155 = vunpack.c.0.s8 %v3154
      %v3156 = vlaneseq
      %v3157 = vshrl.u32 %v3156, 7
      %v3158 = vsub.s32 %v3155, %v3157
      %v3159 = vrot.slane %v3145, %v3158
      %v3160 = vcombine.low %v3152, %v3159
      %v3161 = vcombine.low %v3023, %v3025
      %v3162 = vcombine.low %v3033, %v3041
      %v3164 = vunpack.c.l.s4 1983009808
      %v3165 = vunpack.c.0.s8 %v3164
      %v3166 = vlaneseq
      %v3167 = vshrl.u32 %v3166, 7
      %v3168 = vsub.s32 %v3165, %v3167
      %v3169 = vrot.slane %v3161, %v3168
      %v3171 = vunpack.c.l.s4 1983009808
      %v3172 = vunpack.c.0.s8 %v3171
      %v3173 = vlaneseq
      %v3174 = vshrl.u32 %v3173, 7
      %v3175 = vsub.s32 %v3172, %v3174
      %v3176 = vrot.slane %v3162, %v3175
      %v3177 = vcombine.low %v3169, %v3176
      %v3178 = vcombine.low %v3042, %v3050
      %v3179 = vcombine.low %v3058, %v3057
      %v3181 = vunpack.c.l.s4 1983009808
      %v3182 = vunpack.c.0.s8 %v3181
      %v3183 = vlaneseq
      %v3184 = vshrl.u32 %v3183, 7
      %v3185 = vsub.s32 %v3182, %v3184
      %v3186 = vrot.slane %v3178, %v3185
      %v3188 = vunpack.c.l.s4 1983009808
      %v3189 = vunpack.c.0.s8 %v3188
      %v3190 = vlaneseq
      %v3191 = vshrl.u32 %v3190, 7
      %v3192 = vsub.s32 %v3189, %v3191
      %v3193 = vrot.slane %v3179, %v3192
      %v3194 = vcombine.low %v3186, %v3193
      %v3195 = vcombine.low %v3059, %v3067
      %v3196 = vcombine.low %v3075, %v3074
      %v3198 = vunpack.c.l.s4 1983009808
      %v3199 = vunpack.c.0.s8 %v3198
      %v3200 = vlaneseq
      %v3201 = vshrl.u32 %v3200, 7
      %v3202 = vsub.s32 %v3199, %v3201
      %v3203 = vrot.slane %v3195, %v3202
      %v3205 = vunpack.c.l.s4 1983009808
      %v3206 = vunpack.c.0.s8 %v3205
      %v3207 = vlaneseq
      %v3208 = vshrl.u32 %v3207, 7
      %v3209 = vsub.s32 %v3206, %v3208
      %v3210 = vrot.slane %v3196, %v3209
      %v3211 = vcombine.low %v3203, %v3210
      %vm3220 = vcmask 121856
      %3221 = vst.msk [vmem:[%s333] sm:$0xff] %vm3220, %v3092
      %3222 = vst.msk [vmem:[%s333 + $0x8] sm:$0xff] %vm3220, %v3109
      %3223 = vst.msk [vmem:[%s333 + $0x10] sm:$0xff] %vm3220, %v3126
      %3224 = vst.msk [vmem:[%s333 + $0x18] sm:$0xff] %vm3220, %v3143
      %3225 = vst.msk [vmem:[%s333 + $0x20] sm:$0xff] %vm3220, %v3160
      %3226 = vst.msk [vmem:[%s333 + $0x28] sm:$0xff] %vm3220, %v3177
      %3227 = vst.msk [vmem:[%s333 + $0x30] sm:$0xff] %vm3220, %v3194
      %3228 = vst.msk [vmem:[%s333 + $0x38] sm:$0xff] %vm3220, %v3211
      %s3229 = smul.u32 4, %s22
      %p3230 = scmp.lt.s32.totalorder %s21, 1
      %s3231 = scalar_select %p3230, %s21, 1
      %p3232 = scmp.lt.s32.totalorder %s3229, 15
      %s3233 = scalar_select %p3232, %s3229, 15
      %s3234 = smul.addr %s3233, 2
      %s3235 = smul.addr %s3231, 32
      %s3236 = sadd.s32 %s3234, %s3235
      %s3237 = smul.addr %s3236, 8
      %s3238 = scalar_lea.vmem %s6, %s3237
      // Predicated region
      $region45: #{tpu_custom_call.1} parent=43 // pred_check
        %p3239 = pneg %p189
      $region46: #{tpu_custom_call.1} parent=43 // pred_check_branch
        %3241 = sbr.rel (%p3239) target = $region48
      $region47: #{tpu_custom_call.1} parent=43 // pred_region
        %s3242 = smul.u32 4, %s22
      $region48: #{tpu_custom_call.1} parent=43 // pred_fallthru
        _
    $region44: #{tpu_custom_call.1} parent=5 // pred_fallthru
      _
    %p3243 = scmp.le.s32.totalorder 2, %s12
    // Predicated region
    $region49: #{tpu_custom_call.1} parent=5 // pred_check
      %p3244 = pneg %p3243
    $region50: #{tpu_custom_call.1} parent=5 // pred_check_branch
      %3246 = sbr.rel (%p3244) target = $region52
    $region51: #{tpu_custom_call.1} parent=5 // pred_region
      %s3247 = ssub.s32 %s12, 2
      // Predicated region
      $region53: #{tpu_custom_call.1} parent=51 // pred_check
        %p3248 = pneg %p195
      $region54: #{tpu_custom_call.1} parent=51 // pred_check_branch
        %3250 = sbr.rel (%p3248) target = $region56
      $region55: #{tpu_custom_call.1} parent=51 // pred_region
        %s3251 = smul.u32 4, %s24
        %p3252 = scmp.lt.s32.totalorder %s23, 1
        %s3253 = scalar_select %p3252, %s23, 1
        %p3254 = scmp.lt.s32.totalorder %s3251, 15
        %s3255 = scalar_select %p3254, %s3251, 15
        %s3256 = smul.addr %s3255, 2
        %s3257 = smul.addr %s3253, 32
        %s3258 = sadd.s32 %s3256, %s3257
        %s3259 = smul.addr %s3258, 8
        %s3260 = scalar_lea.vmem %s6, %s3259
      $region56: #{tpu_custom_call.1} parent=51 // pred_fallthru
        _
    $region52: #{tpu_custom_call.1} parent=5 // pred_fallthru
      _
  $region6: #{tpu_custom_call.1} parent=0 // loop_footer
    %s16 = sadd.s32 1, %s12
  $region7: #{tpu_custom_call.1} parent=0 // loop_footer_branch
    %11 = sbr.rel target = $region3
  $region8: #{tpu_custom_call.1} parent=0 // loop_exit
    _

</llo_original>
